<compile_context>
chip_gen: v7x
topology: tpu7x:2x2x1
jax: 0.10.0
libtpu: 0.0.40
codegen_flags: <defaults>
</compile_context>

<pallas_src>
import math
from functools import partial

import jax
import jax.numpy as jnp
from jax.experimental import pallas as pl
from jax.experimental.pallas import tpu as pltpu


_VMEM_LIMIT_BYTES = 32 * 1024 * 1024   # explicit, portable across v5e/v6e/v7x


# ----------------------------------------------------------------------------
# Pallas kernels
# ----------------------------------------------------------------------------

def _mm_bn_kernel(x_ref, w_ref, t_ref, o_ref, acc_ref, *, relu):
    @pl.when(pl.program_id(2) == 0)
    def _():
        acc_ref[...] = jnp.zeros_like(acc_ref)

    acc_ref[...] += jnp.dot(x_ref[...], w_ref[...],
                            preferred_element_type=jnp.float32)

    @pl.when(pl.program_id(2) == pl.num_programs(2) - 1)
    def _():
        y = acc_ref[...] + t_ref[...].astype(jnp.float32)
        if relu:
            y = jnp.maximum(y, 0.0)
        o_ref[...] = y.astype(o_ref.dtype)


def _mm_bn_res_kernel(x_ref, w_ref, t_ref, r_ref, o_ref, acc_ref, *, relu):
    @pl.when(pl.program_id(2) == 0)
    def _():
        acc_ref[...] = jnp.zeros_like(acc_ref)

    acc_ref[...] += jnp.dot(x_ref[...], w_ref[...],
                            preferred_element_type=jnp.float32)

    @pl.when(pl.program_id(2) == pl.num_programs(2) - 1)
    def _():
        y = (acc_ref[...] + t_ref[...].astype(jnp.float32)
             + r_ref[...].astype(jnp.float32))
        if relu:
            y = jnp.maximum(y, 0.0)
        o_ref[...] = y.astype(o_ref.dtype)


def _pick_tm(M):
    """Largest M tile <= 512 with small padding waste (8/16-aligned)."""
    if M <= 512:
        return ((M + 7) // 8) * 8          # single full-M tile, minimal pad
    slack = max(M // 32, 16)
    for t in range(512, 0, -16):           # 16-aligned: safe for bf16 sublanes
        mp = ((M + t - 1) // t) * t
        if mp - M <= slack:
            return t
    return 128


def matmul_bn(x, w, shift, relu, residual=None, *, out_dtype=jnp.bfloat16):
    """out = [relu]((x @ w) + shift [+ residual]).

    x: (M, K) bf16 patches; w: (K, N) bf16 with the eval-mode BN scale already
    folded into its columns; shift: (N,) f32.  f32 MXU accumulation over a K
    grid axis, f32 epilogue, bf16 store.
    """
    M, K = x.shape
    Kw, N = w.shape
    if Kw != K:                            # stem: K padded to a lane multiple
        x = jnp.pad(x, ((0, 0), (0, Kw - K)))
        K = Kw

    tm = _pick_tm(M)
    tn = min(N, 256)
    # Keep at least 2 parallel grid steps so both v7x TensorCores get work.
    if pl.cdiv(M, tm) * (N // tn) < 2 and N >= 256:
        tn = 128
    if K > 1280 and K % 1152 == 0:
        tk = 1152
    elif K > 1280 and K % 1024 == 0:
        tk = 1024
    else:
        tk = K

    Mp = pl.cdiv(M, tm) * tm
    if Mp != M:
        x = jnp.pad(x, ((0, Mp - M), (0, 0)))
        if residual is not None:
            residual = jnp.pad(residual, ((0, Mp - M), (0, 0)))

    grid = (Mp // tm, N // tn, K // tk)

    x_spec = pl.BlockSpec((tm, tk), lambda i, j, k: (i, k))
    w_spec = pl.BlockSpec((tk, tn), lambda i, j, k: (k, j))
    t_spec = pl.BlockSpec((1, tn), lambda i, j, k: (0, j))
    o_spec = pl.BlockSpec((tm, tn), lambda i, j, k: (i, j))

    in_specs = [x_spec, w_spec, t_spec]
    args = [x, w, shift.reshape(1, N).astype(jnp.float32)]
    if residual is not None:
        in_specs.append(pl.BlockSpec((tm, tn), lambda i, j, k: (i, j)))
        args.append(residual)
        kernel = partial(_mm_bn_res_kernel, relu=relu)
    else:
        kernel = partial(_mm_bn_kernel, relu=relu)

    out = pl.pallas_call(
        kernel,
        out_shape=jax.ShapeDtypeStruct((Mp, N), out_dtype),
        grid=grid,
        in_specs=in_specs,
        out_specs=o_spec,
        scratch_shapes=[pltpu.VMEM((tm, tn), jnp.float32)],
        compiler_params=pltpu.CompilerParams(
            dimension_semantics=("parallel", "parallel", "arbitrary"),
            vmem_limit_bytes=_VMEM_LIMIT_BYTES),
    )(*args)
    if Mp != M:
        out = out[:M]
    return out


def _maxpool_kernel(x_ref, o_ref):
    # x_ref: (1, Hp, Wp//2, 2C) -- adjacent padded W columns packed along lanes
    # o_ref: (1, Ho, Wo, C)
    ho, wo, c = o_ref.shape[1], o_ref.shape[2], o_ref.shape[3]
    lo = x_ref[0, :, 0:wo, 0:c]            # padded cols 2*wo
    hi = x_ref[0, :, 0:wo, c:2 * c]        # padded cols 2*wo + 1
    lo1 = x_ref[0, :, 1:wo + 1, 0:c]       # padded cols 2*wo + 2
    cm = jnp.maximum(jnp.maximum(lo, hi), lo1)      # (Hp, Wo, C)
    v = cm.reshape(ho + 1, 2, wo, c)                # Hp == 2*Ho + 2
    o_ref[0] = jnp.maximum(jnp.maximum(v[:ho, 0], v[:ho, 1]),
                           v[1:ho + 1, 0])


@jax.jit
def maxpool_3x3_s2(x):
    """MaxPool2d(kernel_size=3, stride=2, padding=1) on NHWC (bf16)."""
    B, H, W, C = x.shape
    Ho = (H + 2 - 3) // 2 + 1
    Wo = (W + 2 - 3) // 2 + 1
    neg = jnp.asarray(-jnp.inf, x.dtype)
    xp = jnp.pad(x, ((0, 0), (1, 1), (1, 1), (0, 0)), constant_values=neg)
    Hp, Wp = H + 2, W + 2
    assert Wp % 2 == 0 and Hp == 2 * Ho + 2 and Wp == 2 * Wo + 2
    # Free contiguous reshape: pack pairs of padded W columns along the lane
    # dim so the kernel reads x exactly once and needs no strided loads.
    xpk = xp.reshape(B, Hp, Wp // 2, 2 * C)
    return pl.pallas_call(
        _maxpool_kernel,
        out_shape=jax.ShapeDtypeStruct((B, Ho, Wo, C), x.dtype),
        grid=(B,),
        in_specs=[pl.BlockSpec((1, Hp, Wp // 2, 2 * C),
                               lambda b: (b, 0, 0, 0))],
        out_specs=pl.BlockSpec((1, Ho, Wo, C), lambda b: (b, 0, 0, 0)),
        compiler_params=pltpu.CompilerParams(
            dimension_semantics=("parallel",)),
    )(xpk)


def _avgpool_kernel(x_ref, o_ref):
    o_ref[...] = jnp.mean(x_ref[...].astype(jnp.float32), axis=1)


@jax.jit
def avgpool_global(x):
    """AvgPool2d(7, stride=1) on a (B, 7, 7, C) bf16 map -> (B, C) f32."""
    B, H, W, C = x.shape
    xr = x.reshape(B, H * W, C)
    return pl.pallas_call(
        _avgpool_kernel,
        out_shape=jax.ShapeDtypeStruct((B, C), jnp.float32),
    )(xr)


def _head_kernel(x_ref, s_ref, t_ref, w1_ref, b1_ref, w2_ref,
                 feat_ref, cls_ref):
    # BN1d (eval, folded) + ReLU
    h = jnp.maximum(x_ref[...] * s_ref[...] + t_ref[...], 0.0)
    # Linear(2048, 128)  (Dropout is identity in eval mode)
    f = jnp.dot(h, w1_ref[...], preferred_element_type=jnp.float32) + b1_ref[...]
    # F.normalize(p=2, dim=1)
    nrm = jnp.sqrt(jnp.sum(f * f, axis=1, keepdims=True))
    fn = f / jnp.maximum(nrm, 1e-12)
    feat_ref[...] = fn
    # cls_fc with row-normalized weight and zero bias (classes padded to 128)
    cls_ref[...] = jnp.dot(fn, w2_ref[...], preferred_element_type=jnp.float32)


@jax.jit
def metric_head(feat, bn_scale, bn_shift, w1, b1, w2_normed_t):
    B = feat.shape[0]
    nc = w2_normed_t.shape[1]
    ncp = max(128, ((nc + 127) // 128) * 128)   # lane-dense classifier output
    w2p = jnp.pad(w2_normed_t, ((0, 0), (0, ncp - nc)))
    feat_n, cls = pl.pallas_call(
        _head_kernel,
        out_shape=(jax.ShapeDtypeStruct((B, 128), jnp.float32),
                   jax.ShapeDtypeStruct((B, ncp), jnp.float32)),
    )(feat, bn_scale.reshape(1, -1), bn_shift.reshape(1, -1),
      w1, b1.reshape(1, -1), w2p)
    return cls[:, :nc], feat_n


# ----------------------------------------------------------------------------
# Conv glue (im2col, bf16) + jitted per-shape conv wrapper
# ----------------------------------------------------------------------------

def _im2col(x, ksize, stride, pad):
    B, H, W, C = x.shape
    Ho = (H + 2 * pad - ksize) // stride + 1
    Wo = (W + 2 * pad - ksize) // stride + 1
    if ksize == 1 and pad == 0:
        patches = x[:, ::stride, ::stride, :].reshape(B * Ho * Wo, C)
        return patches, (B, Ho, Wo)
    xp = jnp.pad(x, ((0, 0), (pad, pad), (pad, pad), (0, 0)))
    cols = [xp[:, dy:dy + stride * Ho:stride, dx:dx + stride * Wo:stride, :]
            for dy in range(ksize) for dx in range(ksize)]
    patches = jnp.concatenate(cols, axis=-1)
    patches = patches.reshape(B * Ho * Wo, ksize * ksize * C)
    return patches, (B, Ho, Wo)


@partial(jax.jit, static_argnames=("ksize", "stride", "pad", "relu"))
def conv_bn(x, w_flat, shift, residual=None, *, ksize, stride, pad, relu):
    """Conv2d(bias=False) + folded BatchNorm [+ residual] [+ ReLU], NHWC bf16."""
    # TODO(synk): the 3x3/7x7 im2col patch matrix is still materialized in HBM
    #             (bf16); fully fusing patch construction into the matmul would
    #             need halo DMAs (memory_space=pl.ANY + make_async_copy).
    patches, (B, Ho, Wo) = _im2col(x, ksize, stride, pad)
    cout = w_flat.shape[1]
    res2d = residual.reshape(-1, cout) if residual is not None else None
    out2d = matmul_bn(patches, w_flat, shift, relu, res2d)
    return out2d.reshape(B, Ho, Wo, cout)


# ----------------------------------------------------------------------------
# Deterministic parameter initialization (synthetic, matches module shapes)
# ----------------------------------------------------------------------------

class _Rng:
    def __init__(self, seed):
        self._key = jax.random.PRNGKey(seed)

    def next(self):
        self._key, k = jax.random.split(self._key)
        return k


def _conv_bn_params(rng, cin, cout, ksize, k_pad=None):
    """He-init conv weight with eval-mode BN scale folded into its columns.

    Returns (w_folded: (Kp, cout) bf16, shift: (cout,) f32)."""
    fan_in = cin * ksize * ksize
    std = math.sqrt(2.0 / fan_in)
    w = jax.random.normal(rng.next(), (ksize, ksize, cin, cout),
                          jnp.float32) * std
    # flatten to (KH*KW*Cin, Cout) -- matches im2col (ky, kx, c) ordering
    w = w.reshape(ksize * ksize * cin, cout)
    gamma = 1.0 + 0.1 * jax.random.normal(rng.next(), (cout,), jnp.float32)
    beta = 0.05 * jax.random.normal(rng.next(), (cout,), jnp.float32)
    rmean = 0.05 * jax.random.normal(rng.next(), (cout,), jnp.float32)
    rvar = 1.0 + 0.1 * jax.random.uniform(rng.next(), (cout,), jnp.float32)
    scale = gamma / jnp.sqrt(rvar + 1e-5)
    shift = beta - rmean * scale
    wf = (w * scale[None, :]).astype(jnp.bfloat16)
    if k_pad is not None and k_pad > wf.shape[0]:
        wf = jnp.pad(wf, ((0, k_pad - wf.shape[0]), (0, 0)))
    return wf, shift


def init_params(seed=0, num_classes=31):
    rng = _Rng(seed)
    params = {}
    # stem: Conv2d(3, 64, 7, stride=2, padding=3) + BN; K=147 padded to 256
    params["stem"] = _conv_bn_params(rng, 3, 64, 7, k_pad=256)

    inplanes = 64
    layers = []
    for planes, blocks, stride in [(64, 3, 1), (128, 4, 2),
                                   (256, 6, 2), (512, 3, 2)]:
        blist = []
        for b in range(blocks):
            s = stride if b == 0 else 1
            blk = {"stride": s}
            blk["c1"] = _conv_bn_params(rng, inplanes, planes, 1)
            blk["c2"] = _conv_bn_params(rng, planes, planes, 3)
            blk["c3"] = _conv_bn_params(rng, planes, planes * 4, 1)
            if b == 0 and (stride != 1 or inplanes != planes * 4):
                blk["down"] = _conv_bn_params(rng, inplanes, planes * 4, 1)
            blist.append(blk)
            inplanes = planes * 4
        layers.append(blist)
    params["layers"] = layers

    # metric_feature: BatchNorm1d(2048) + ReLU + Linear(2048,128) + Dropout
    gamma = 1.0 + 0.1 * jax.random.normal(rng.next(), (2048,), jnp.float32)
    beta = 0.05 * jax.random.normal(rng.next(), (2048,), jnp.float32)
    rmean = 0.05 * jax.random.normal(rng.next(), (2048,), jnp.float32)
    rvar = 1.0 + 0.1 * jax.random.uniform(rng.next(), (2048,), jnp.float32)
    bn_s = gamma / jnp.sqrt(rvar + 1e-5)
    params["bn1d"] = (bn_s, beta - rmean * bn_s)

    bound1 = 1.0 / math.sqrt(2048)
    params["W1"] = jax.random.uniform(rng.next(), (2048, 128), jnp.float32,
                                      -bound1, bound1)
    params["b1"] = jax.random.uniform(rng.next(), (128,), jnp.float32,
                                      -bound1, bound1)
    # cls_fc: Linear(128, num_classes); weight row-normalized in forward,
    # bias zero-filled in forward.
    bound2 = 1.0 / math.sqrt(128)
    params["W2"] = jax.random.uniform(rng.next(), (num_classes, 128),
                                      jnp.float32, -bound2, bound2)
    return params


# ----------------------------------------------------------------------------
# Forward pass
# ----------------------------------------------------------------------------

def _bottleneck(x, blk):
    s = blk["stride"]
    w1, t1 = blk["c1"]
    w2, t2 = blk["c2"]
    w3, t3 = blk["c3"]
    out = conv_bn(x, w1, t1, ksize=1, stride=1, pad=0, relu=True)
    out = conv_bn(out, w2, t2, ksize=3, stride=s, pad=1, relu=True)
    if "down" in blk:
        wd, td = blk["down"]
        res = conv_bn(x, wd, td, ksize=1, stride=s, pad=0, relu=False)
    else:
        res = x
    # conv3 + bn3 + residual add + ReLU fused in one Pallas kernel
    out = conv_bn(out, w3, t3, residual=res,
                  ksize=1, stride=1, pad=0, relu=True)
    return out


def resnet_features(x_nchw, params):
    x = jnp.transpose(x_nchw, (0, 2, 3, 1)).astype(jnp.bfloat16)  # NCHW->NHWC
    ws, ts = params["stem"]
    x = conv_bn(x, ws, ts, ksize=7, stride=2, pad=3, relu=True)
    x = maxpool_3x3_s2(x)
    for layer in params["layers"]:
        for blk in layer:
            x = _bottleneck(x, blk)
    return avgpool_global(x)  # (B, 2048) f32 == x.view(B, -1)


def resnet_forward(source, target, params):
    """Eval-mode forward: returns (source_cls, source_feature)."""
    del target  # unused in eval mode (training branch not implemented)
    feat = resnet_features(source, params)
    # torch.no_grad(): cls_fc.weight /= ||row||, bias = 0
    w2 = params["W2"]
    w2n = w2 / jnp.linalg.norm(w2, axis=1, keepdims=True)
    bn_s, bn_t = params["bn1d"]
    cls, feat_n = metric_head(feat, bn_s, bn_t,
                              params["W1"], params["b1"], w2n.T)
    return cls, feat_n


# ----------------------------------------------------------------------------
# Main
# ----------------------------------------------------------------------------

if __name__ == "__main__":
    # ResNet-50 + AvgPool2d(7) + Linear(2048, ...) implies 224x224x3 inputs.
    key = jax.random.PRNGKey(0)
    ks, kt = jax.random.split(key)
    source = jax.random.normal(ks, (2, 3, 224, 224), jnp.float32)
    target = jax.random.normal(kt, (2, 3, 224, 224), jnp.float32)

    params = init_params(seed=0, num_classes=31)

    src_cls, src_feat = resnet_forward(source, target, params)
    jax.block_until_ready((src_cls, src_feat))

    assert src_cls.shape == (2, 31), src_cls.shape
    assert src_feat.shape == (2, 128), src_feat.shape
    assert bool(jnp.all(jnp.isfinite(src_cls))) and bool(jnp.all(jnp.isfinite(src_feat)))
    print("KERNEL_OK")
</pallas_src>

<mosaic_0001>
module attributes {stable_mosaic.version = 11 : i64} {
  func.func @_mm_bn_kernel(%arg0: i32, %arg1: i32, %arg2: i32, %arg3: memref<512x256xbf16, #tpu.memory_space<vmem>>, %arg4: memref<256x64xbf16, #tpu.memory_space<vmem>>, %arg5: memref<1x64xf32, #tpu.memory_space<vmem>>, %arg6: memref<512x64xbf16, #tpu.memory_space<vmem>>, %arg7: memref<512x64xf32, #tpu.memory_space<vmem>>) attributes {dimension_semantics = [#tpu.dimension_semantics<parallel>, #tpu.dimension_semantics<parallel>, #tpu.dimension_semantics<arbitrary>], iteration_bounds = array<i64: 49, 1, 1>, scalar_prefetch = 0 : i64, scratch_operands = 1 : i64, tpu.core_type = #tpu.core_type<tc>, window_params = [{transform_indices = @transform_0, window_bounds = array<i64: 512, 256>}, {transform_indices = @transform_1, window_bounds = array<i64: 256, 64>}, {transform_indices = @transform_2, window_bounds = array<i64: 1, 64>}, {transform_indices = @transform_3, window_bounds = array<i64: 512, 64>}]} {
    %c0_i32 = arith.constant 0 : i32
    %0 = arith.cmpi eq, %arg2, %c0_i32 : i32
    %1 = arith.extui %0 : i1 to i32
    %c0_i32_0 = arith.constant 0 : i32
    %2 = arith.cmpi ne, %1, %c0_i32_0 : i32
    scf.if %2 {
      %cst_10 = arith.constant 0.000000e+00 : f32
      %12 = vector.broadcast %cst_10 : f32 to vector<512x64xf32>
      %c0_11 = arith.constant 0 : index
      %c0_12 = arith.constant 0 : index
      %13 = vector.load %arg7[%c0_11, %c0_12] : memref<512x64xf32, #tpu.memory_space<vmem>>, vector<512x64xf32>
      tpu.vector_store %arg7[%c0_11, %c0_12], %12 {strides = array<i32>} : memref<512x64xf32, #tpu.memory_space<vmem>>, vector<512x64xf32>,
    } else {
    }
    %c0 = arith.constant 0 : index
    %c0_1 = arith.constant 0 : index
    %3 = vector.load %arg7[%c0, %c0_1] : memref<512x64xf32, #tpu.memory_space<vmem>>, vector<512x64xf32>
    %c0_2 = arith.constant 0 : index
    %c0_3 = arith.constant 0 : index
    %4 = vector.load %arg3[%c0_2, %c0_3] : memref<512x256xbf16, #tpu.memory_space<vmem>>, vector<512x256xbf16>
    %c0_4 = arith.constant 0 : index
    %c0_5 = arith.constant 0 : index
    %5 = vector.load %arg4[%c0_4, %c0_5] : memref<256x64xbf16, #tpu.memory_space<vmem>>, vector<256x64xbf16>
    %cst = arith.constant dense<0.000000e+00> : vector<512x64xf32>
    %6 = tpu.matmul %4, %5, %cst {dimension_numbers = #tpu.dot_dimension_numbers<[1], [0], [0], [1], [0, 0, 1, 1], [], []>} : vector<512x256xbf16>, vector<256x64xbf16>, vector<512x64xf32> -> vector<512x64xf32>
    %7 = arith.addf %3, %6 : vector<512x64xf32>
    %c0_6 = arith.constant 0 : index
    %c0_7 = arith.constant 0 : index
    %8 = vector.load %arg7[%c0_6, %c0_7] : memref<512x64xf32, #tpu.memory_space<vmem>>, vector<512x64xf32>
    tpu.vector_store %arg7[%c0_6, %c0_7], %7 {strides = array<i32>} : memref<512x64xf32, #tpu.memory_space<vmem>>, vector<512x64xf32>,
    %c0_i32_8 = arith.constant 0 : i32
    %9 = arith.cmpi eq, %arg2, %c0_i32_8 : i32
    %10 = arith.extui %9 : i1 to i32
    %c0_i32_9 = arith.constant 0 : i32
    %11 = arith.cmpi ne, %10, %c0_i32_9 : i32
    scf.if %11 {
      %c0_10 = arith.constant 0 : index
      %c0_11 = arith.constant 0 : index
      %12 = vector.load %arg7[%c0_10, %c0_11] : memref<512x64xf32, #tpu.memory_space<vmem>>, vector<512x64xf32>
      %c0_12 = arith.constant 0 : index
      %c0_13 = arith.constant 0 : index
      %13 = vector.load %arg5[%c0_12, %c0_13] : memref<1x64xf32, #tpu.memory_space<vmem>>, vector<1x64xf32>
      %14 = vector.broadcast %13 : vector<1x64xf32> to vector<512x64xf32>
      %15 = arith.addf %12, %14 : vector<512x64xf32>
      %cst_14 = arith.constant 0.000000e+00 : f32
      %16 = vector.broadcast %cst_14 : f32 to vector<512x64xf32>
      %17 = arith.maximumf %15, %16 : vector<512x64xf32>
      %18 = arith.truncf %17 : vector<512x64xf32> to vector<512x64xbf16>
      %c0_15 = arith.constant 0 : index
      %c0_16 = arith.constant 0 : index
      %19 = vector.load %arg6[%c0_15, %c0_16] : memref<512x64xbf16, #tpu.memory_space<vmem>>, vector<512x64xbf16>
      tpu.vector_store %arg6[%c0_15, %c0_16], %18 {strides = array<i32>} : memref<512x64xbf16, #tpu.memory_space<vmem>>, vector<512x64xbf16>,
    } else {
    }
    return
  }
  func.func @transform_0(%arg0: i32, %arg1: i32, %arg2: i32) -> (i32, i32) {
    %c0_i32 = arith.constant 0 : i32
    return %arg0, %arg2 : i32, i32
  }
  func.func @transform_1(%arg0: i32, %arg1: i32, %arg2: i32) -> (i32, i32) {
    %c0_i32 = arith.constant 0 : i32
    return %arg2, %arg1 : i32, i32
  }
  func.func @transform_2(%arg0: i32, %arg1: i32, %arg2: i32) -> (i32, i32) {
    %c0_i32 = arith.constant 0 : i32
    %c0_i32_0 = arith.constant 0 : i32
    return %c0_i32, %arg1 : i32, i32
  }
  func.func @transform_3(%arg0: i32, %arg1: i32, %arg2: i32) -> (i32, i32) {
    %c0_i32 = arith.constant 0 : i32
    return %arg0, %arg1 : i32, i32
  }
}

</mosaic_0001>

<llo_original>
// kernel: conv_bn.1
$region0: #{conv_bn.1}
  #allocation0 [shape = 'u32[]', space=smem, size = 0x4, offset = 0x4, fixed_abs, tag = 'smem constant byte address 0x4 - core index']
  #allocation1 [shape = 'u32[144,128]{1,0:T(1,128)}', space=vmem, size = 0x12000, scoped, tag = 'internal scratch']
  #allocation2 [shape = 'f32[512,64]{1,0:T(8,128)}', space=vmem, size = 0x40000, scoped, tag = 'scratch operand']
  %s0 = inlined_call_operand.vmem [shape: bf16[25088,256], index: 0, kind: input, shape index: {}]
  %s1 = inlined_call_operand.vmem [shape: bf16[256,64], index: 1, kind: input, shape index: {}]
  %s2 = inlined_call_operand.vmem [shape: f32[1,64], index: 2, kind: input, shape index: {}]
  %s3 = inlined_call_operand.vmem [shape: bf16[25088,64], index: 3, kind: output, shape index: {}]
  %s4 = sld [smem:[#allocation0]]
  $region53: #{conv_bn.1} parent=0
    _
  %s6 = ssub.s32 1, %s4
  %s7 = scalar_select 0, %s6, %s4
  loop: start=0, step=1, limit=51
  $region2: #{conv_bn.1} parent=0 // loop_pre_header
    _
  $region3: #{conv_bn.1} parent=0 // loop_header
    %s9 = sphi 0, %s13
    %p10 = scmp.ge.s32.totalorder %s9, 51
    %s16 = sphi 0, %s35
    %s17 = sphi 0, %s31
    %s18 = sphi 0, %s27
    %s19 = sphi 0, %s16
    %s20 = sphi 0, %s17
    %s21 = sphi 0, %s18
    %s22 = sphi 0, %s19
    %s23 = sphi 0, %s20
    %s24 = sphi 0, %s21
    %s40 = sphi 0, %s42
    %s43 = sphi 0, %s40
    %s44 = sphi 0, %s43
    %s60 = sphi 0, %s44
    %s68 = sphi 0, %s70
    %s71 = sphi 0, %s68
    %s72 = sphi 0, %s71
    %s88 = sphi 0, %s72
    %s94 = sphi 0, %s96
    %s97 = sphi 0, %s94
    %s98 = sphi 0, %s97
    %s114 = sphi 0, %s98
    %s122 = sphi 0, %s124
    %s125 = sphi 0, %s122
    %s126 = sphi 0, %s125
    %s142 = sphi 0, %s126
  $region4: #{conv_bn.1} parent=0 // loop_header_branch
    %12 = sbr.rel (%p10) target = $region8
  $region5: #{conv_bn.1} parent=0 // loop_body
    %s14 = ssub.s32 %s9, 1
    %s15 = ssub.s32 %s9, 2
    %s25 = sadd.s32 1, %s18
    %p26 = scmp.ge.s32.totalorder %s25, 1
    %s27 = scalar_select %p26, 0, %s25
    %s28 = sadd.s32 1, %s17
    %s29 = scalar_select %p26, %s28, %s17
    %p30 = scmp.ge.s32.totalorder %s29, 1
    %s31 = scalar_select %p30, 0, %s29
    %s32 = sadd.s32 1, %s16
    %s33 = scalar_select %p30, %s32, %s16
    %p34 = scmp.ge.s32.totalorder %s33, 49
    %s35 = scalar_select %p34, 0, %s33
    %s36 = ssub.s32 %s16, %s35
    %s37 = ssub.s32 %s18, %s27
    %s38 = sor.u32 %s36, %s37
    %p39 = scmp.eq.s32.totalorder %s38, 0
    %s41 = sadd.s32 %s40, 1
    %s42 = scalar_select %p39, %s40, %s41
    %p45 = pneg %p39
    %p46 = scmp.eq.s32.totalorder %s9, 48
    %p47 = por %p45, %p46
    %p48 = scmp.ne.s32.totalorder %s40, %s43
    %p49 = scmp.eq.s32.totalorder %s9, 0
    %p50 = por %p48, %p49
    %p51 = scmp.ne.s32.totalorder %s40, %s43
    %p52 = scmp.eq.s32.totalorder %s14, 48
    %p53 = por %p51, %p52
    %p54 = scmp.ne.s32.totalorder %s43, %s44
    %p55 = scmp.eq.s32.totalorder %s14, 0
    %p56 = por %p54, %p55
    %p57 = scmp.ne.s32.totalorder %s43, %s44
    %p58 = scmp.eq.s32.totalorder %s15, 48
    %p59 = por %p57, %p58
    %p61 = scmp.ne.s32.totalorder %s44, %s60
    %p62 = scmp.eq.s32.totalorder %s15, 0
    %p63 = por %p61, %p62
    %s64 = ssub.s32 %s18, %s27
    %s65 = ssub.s32 %s17, %s31
    %s66 = sor.u32 %s64, %s65
    %p67 = scmp.eq.s32.totalorder %s66, 0
    %s69 = sadd.s32 %s68, 1
    %s70 = scalar_select %p67, %s68, %s69
    %p73 = pneg %p67
    %p74 = scmp.eq.s32.totalorder %s9, 48
    %p75 = por %p73, %p74
    %p76 = scmp.ne.s32.totalorder %s68, %s71
    %p77 = scmp.eq.s32.totalorder %s9, 0
    %p78 = por %p76, %p77
    %p79 = scmp.ne.s32.totalorder %s68, %s71
    %p80 = scmp.eq.s32.totalorder %s14, 48
    %p81 = por %p79, %p80
    %p82 = scmp.ne.s32.totalorder %s71, %s72
    %p83 = scmp.eq.s32.totalorder %s14, 0
    %p84 = por %p82, %p83
    %p85 = scmp.ne.s32.totalorder %s71, %s72
    %p86 = scmp.eq.s32.totalorder %s15, 48
    %p87 = por %p85, %p86
    %p89 = scmp.ne.s32.totalorder %s72, %s88
    %p90 = scmp.eq.s32.totalorder %s15, 0
    %p91 = por %p89, %p90
    %s92 = ssub.s32 %s17, %s31
    %p93 = scmp.eq.s32.totalorder %s92, 0
    %s95 = sadd.s32 %s94, 1
    %s96 = scalar_select %p93, %s94, %s95
    %p99 = pneg %p93
    %p100 = scmp.eq.s32.totalorder %s9, 48
    %p101 = por %p99, %p100
    %p102 = scmp.ne.s32.totalorder %s94, %s97
    %p103 = scmp.eq.s32.totalorder %s9, 0
    %p104 = por %p102, %p103
    %p105 = scmp.ne.s32.totalorder %s94, %s97
    %p106 = scmp.eq.s32.totalorder %s14, 48
    %p107 = por %p105, %p106
    %p108 = scmp.ne.s32.totalorder %s97, %s98
    %p109 = scmp.eq.s32.totalorder %s14, 0
    %p110 = por %p108, %p109
    %p111 = scmp.ne.s32.totalorder %s97, %s98
    %p112 = scmp.eq.s32.totalorder %s15, 48
    %p113 = por %p111, %p112
    %p115 = scmp.ne.s32.totalorder %s98, %s114
    %p116 = scmp.eq.s32.totalorder %s15, 0
    %p117 = por %p115, %p116
    %s118 = ssub.s32 %s16, %s35
    %s119 = ssub.s32 %s17, %s31
    %s120 = sor.u32 %s118, %s119
    %p121 = scmp.eq.s32.totalorder %s120, 0
    %s123 = sadd.s32 %s122, 1
    %s124 = scalar_select %p121, %s122, %s123
    %p127 = pneg %p121
    %p128 = scmp.eq.s32.totalorder %s9, 48
    %p129 = por %p127, %p128
    %p130 = scmp.ne.s32.totalorder %s122, %s125
    %p131 = scmp.eq.s32.totalorder %s9, 0
    %p132 = por %p130, %p131
    %p133 = scmp.ne.s32.totalorder %s122, %s125
    %p134 = scmp.eq.s32.totalorder %s14, 48
    %p135 = por %p133, %p134
    %p136 = scmp.ne.s32.totalorder %s125, %s126
    %p137 = scmp.eq.s32.totalorder %s14, 0
    %p138 = por %p136, %p137
    %p139 = scmp.ne.s32.totalorder %s125, %s126
    %p140 = scmp.eq.s32.totalorder %s15, 48
    %p141 = por %p139, %p140
    %p143 = scmp.ne.s32.totalorder %s126, %s142
    %p144 = scmp.eq.s32.totalorder %s15, 0
    %p145 = por %p143, %p144
    %p146 = scmp.le.s32.totalorder 1, %s9
    %p147 = scmp.lt.s32.totalorder %s9, 50
    %p148 = pnand %p146, %p147
    %p149 = pneg %p148
    // Predicated region
    $region9: #{conv_bn.1} parent=5 // pred_check
      _
    $region10: #{conv_bn.1} parent=5 // pred_check_branch
      %151 = sbr.rel (%p148) target = $region12
    $region11: #{conv_bn.1} parent=5 // pred_region
      %s152 = ssub.s32 %s9, 1
      // Predicated region
      $region13: #{conv_bn.1} parent=11 // pred_check
        %p153 = pneg %p84
      $region14: #{conv_bn.1} parent=11 // pred_check_branch
        %155 = sbr.rel (%p153) target = $region16
      $region15: #{conv_bn.1} parent=11 // pred_region
        %s156 = smul.u32 32, %s21
        %p157 = scmp.lt.s32.totalorder %s156, 31
        %s158 = scalar_select %p157, %s156, 31
        %p159 = scmp.lt.s32.totalorder %s20, 0
        %s160 = scalar_select %p159, %s20, 0
        %s161 = sadd.s32 %s160, %s158
        %s162 = smul.addr %s161, 4
        %s163 = scalar_lea.vmem %s1, %s162
        %s164 = smul.u32 32, %s21
      $region16: #{conv_bn.1} parent=11 // pred_fallthru
        _
      // Predicated region
      $region17: #{conv_bn.1} parent=11 // pred_check
        %p165 = pneg %p110
      $region18: #{conv_bn.1} parent=11 // pred_check_branch
        %167 = sbr.rel (%p165) target = $region20
      $region19: #{conv_bn.1} parent=11 // pred_region
        %p168 = scmp.lt.s32.totalorder %s20, 0
        %s169 = scalar_select %p168, %s20, 0
        %s170 = scalar_lea.vmem %s2, %s169
      $region20: #{conv_bn.1} parent=11 // pred_fallthru
        _
    $region12: #{conv_bn.1} parent=5 // pred_fallthru
      _
    %p171 = scmp.lt.s32.totalorder %s9, 49
    // Predicated region
    $region21: #{conv_bn.1} parent=5 // pred_check
      %p172 = pneg %p171
    $region22: #{conv_bn.1} parent=5 // pred_check_branch
      %174 = sbr.rel (%p172) target = $region24
    $region23: #{conv_bn.1} parent=5 // pred_region
      // Predicated region
      $region25: #{conv_bn.1} parent=23 // pred_check
        %p175 = pneg %p50
      $region26: #{conv_bn.1} parent=23 // pred_check_branch
        %177 = sbr.rel (%p175) target = $region28
      $region27: #{conv_bn.1} parent=23 // pred_region
        %s178 = smul.u32 64, %s16
        %s179 = smul.u32 2, %s18
        %p180 = scmp.lt.s32.totalorder %s178, 3135
        %s181 = scalar_select %p180, %s178, 3135
        %p182 = scmp.lt.s32.totalorder %s179, 1
        %s183 = scalar_select %p182, %s179, 1
        %s184 = smul.addr %s181, 2
        %s185 = sadd.s32 %s183, %s184
        %s186 = smul.addr %s185, 4
        %s187 = scalar_lea.vmem %s0, %s186
        %s188 = smul.u32 64, %s16
        %s189 = smul.u32 2, %s18
      $region28: #{conv_bn.1} parent=23 // pred_fallthru
        _
    $region24: #{conv_bn.1} parent=5 // pred_fallthru
      _
    %p190 = scmp.le.s32.totalorder 1, %s9
    %p191 = scmp.lt.s32.totalorder %s9, 50
    %p192 = pnand %p190, %p191
    %p193 = pneg %p192
    // Predicated region
    $region29: #{conv_bn.1} parent=5 // pred_check
      _
    $region30: #{conv_bn.1} parent=5 // pred_check_branch
      %195 = sbr.rel (%p192) target = $region32
    $region31: #{conv_bn.1} parent=5 // pred_region
      %s196 = ssub.s32 %s9, 1
      %s197 = smul.u32 64, %s19
      %s198 = smul.u32 2, %s21
      %p199 = scmp.lt.s32.totalorder %s197, 3135
      %s200 = scalar_select %p199, %s197, 3135
      %p201 = scmp.lt.s32.totalorder %s198, 1
      %s202 = scalar_select %p201, %s198, 1
      %s203 = smul.addr %s200, 2
      %s204 = sadd.s32 %s202, %s203
      %s205 = smul.addr %s204, 4
      %s206 = scalar_lea.vmem %s0, %s205
      %p207 = pneg %p56
      %p208 = pneg %p53
      %s209 = smul.u32 32, %s21
      %p210 = scmp.lt.s32.totalorder %s209, 31
      %s211 = scalar_select %p210, %s209, 31
      %p212 = scmp.lt.s32.totalorder %s20, 0
      %s213 = scalar_select %p212, %s20, 0
      %s214 = sadd.s32 %s213, %s211
      %s215 = smul.addr %s214, 4
      %s216 = scalar_lea.vmem %s1, %s215
      %p217 = pneg %p84
      %p218 = pneg %p81
      %p219 = scmp.lt.s32.totalorder %s20, 0
      %s220 = scalar_select %p219, %s20, 0
      %s221 = scalar_lea.vmem %s2, %s220
      %p222 = pneg %p110
      %p223 = pneg %p107
      %p224 = pneg %p138
      %p225 = pneg %p135
      %s226 = smul.u32 64, %s19
      %p227 = scmp.lt.s32.totalorder %s226, 3135
      %s228 = scalar_select %p227, %s226, 3135
      %p229 = scmp.lt.s32.totalorder %s20, 0
      %s230 = scalar_select %p229, %s20, 0
      %s231 = sadd.s32 %s230, %s228
      %s232 = smul.addr %s231, 4
      %s233 = scalar_lea.vmem %s3, %s232
      %s234 = smul.u32 64, %s19
      %s235 = smul.u32 2, %s21
      %p236 = scmp.lt.s32.totalorder %s234, 3135
      %s237 = scalar_select %p236, %s234, 3135
      %p238 = scmp.lt.s32.totalorder %s235, 1
      %s239 = scalar_select %p238, %s235, 1
      %s240 = smul.addr %s237, 2
      %s241 = sadd.s32 %s239, %s240
      %s242 = smul.addr %s241, 4
      %s243 = scalar_lea.vmem %s0, %s242
      %s244 = smul.u32 64, %s19
      %s245 = smul.u32 2, %s21
      %s246 = smul.u32 32, %s21
      %p247 = scmp.lt.s32.totalorder %s246, 31
      %s248 = scalar_select %p247, %s246, 31
      %p249 = scmp.lt.s32.totalorder %s20, 0
      %s250 = scalar_select %p249, %s20, 0
      %s251 = sadd.s32 %s250, %s248
      %s252 = smul.addr %s251, 4
      %s253 = scalar_lea.vmem %s1, %s252
      %s254 = smul.u32 32, %s21
      %p255 = scmp.lt.s32.totalorder %s20, 0
      %s256 = scalar_select %p255, %s20, 0
      %s257 = scalar_lea.vmem %s2, %s256
      %s258 = smul.u32 64, %s19
      %p259 = scmp.lt.s32.totalorder %s258, 3135
      %s260 = scalar_select %p259, %s258, 3135
      %p261 = scmp.lt.s32.totalorder %s20, 0
      %s262 = scalar_select %p261, %s20, 0
      %s263 = sadd.s32 %s262, %s260
      %s264 = smul.addr %s263, 4
      %s265 = scalar_lea.vmem %s3, %s264
      %s266 = smul.u32 64, %s19
      %p268 = scmp.eq.s32.totalorder %s21, 0
      // Predicated region
      $region33: #{conv_bn.1} parent=31 // pred_check
        %p269 = pneg %p268
      $region34: #{conv_bn.1} parent=31 // pred_check_branch
        %271 = sbr.rel (%p269) target = $region36
      $region35: #{conv_bn.1} parent=31 // pred_region
        %vm272 = vcmask 523264
        %273 = vst.msk [vmem:[#allocation2] sm:$0xff] %vm272, 0.0
        %274 = vst.msk [vmem:[#allocation2 + $0x8] sm:$0xff] %vm272, 0.0
        %275 = vst.msk [vmem:[#allocation2 + $0x10] sm:$0xff] %vm272, 0.0
        %276 = vst.msk [vmem:[#allocation2 + $0x18] sm:$0xff] %vm272, 0.0
        %277 = vst.msk [vmem:[#allocation2 + $0x20] sm:$0xff] %vm272, 0.0
        %278 = vst.msk [vmem:[#allocation2 + $0x28] sm:$0xff] %vm272, 0.0
        %279 = vst.msk [vmem:[#allocation2 + $0x30] sm:$0xff] %vm272, 0.0
        %280 = vst.msk [vmem:[#allocation2 + $0x38] sm:$0xff] %vm272, 0.0
        %281 = vst.msk [vmem:[#allocation2 + $0x40] sm:$0xff] %vm272, 0.0
        %282 = vst.msk [vmem:[#allocation2 + $0x48] sm:$0xff] %vm272, 0.0
        %283 = vst.msk [vmem:[#allocation2 + $0x50] sm:$0xff] %vm272, 0.0
        %284 = vst.msk [vmem:[#allocation2 + $0x58] sm:$0xff] %vm272, 0.0
        %285 = vst.msk [vmem:[#allocation2 + $0x60] sm:$0xff] %vm272, 0.0
        %286 = vst.msk [vmem:[#allocation2 + $0x68] sm:$0xff] %vm272, 0.0
        %287 = vst.msk [vmem:[#allocation2 + $0x70] sm:$0xff] %vm272, 0.0
        %288 = vst.msk [vmem:[#allocation2 + $0x78] sm:$0xff] %vm272, 0.0
        %289 = vst.msk [vmem:[#allocation2 + $0x80] sm:$0xff] %vm272, 0.0
        %290 = vst.msk [vmem:[#allocation2 + $0x88] sm:$0xff] %vm272, 0.0
        %291 = vst.msk [vmem:[#allocation2 + $0x90] sm:$0xff] %vm272, 0.0
        %292 = vst.msk [vmem:[#allocation2 + $0x98] sm:$0xff] %vm272, 0.0
        %293 = vst.msk [vmem:[#allocation2 + $0xa0] sm:$0xff] %vm272, 0.0
        %294 = vst.msk [vmem:[#allocation2 + $0xa8] sm:$0xff] %vm272, 0.0
        %295 = vst.msk [vmem:[#allocation2 + $0xb0] sm:$0xff] %vm272, 0.0
        %296 = vst.msk [vmem:[#allocation2 + $0xb8] sm:$0xff] %vm272, 0.0
        %297 = vst.msk [vmem:[#allocation2 + $0xc0] sm:$0xff] %vm272, 0.0
        %298 = vst.msk [vmem:[#allocation2 + $0xc8] sm:$0xff] %vm272, 0.0
        %299 = vst.msk [vmem:[#allocation2 + $0xd0] sm:$0xff] %vm272, 0.0
        %300 = vst.msk [vmem:[#allocation2 + $0xd8] sm:$0xff] %vm272, 0.0
        %301 = vst.msk [vmem:[#allocation2 + $0xe0] sm:$0xff] %vm272, 0.0
        %302 = vst.msk [vmem:[#allocation2 + $0xe8] sm:$0xff] %vm272, 0.0
        %303 = vst.msk [vmem:[#allocation2 + $0xf0] sm:$0xff] %vm272, 0.0
        %304 = vst.msk [vmem:[#allocation2 + $0xf8] sm:$0xff] %vm272, 0.0
        %305 = vst.msk [vmem:[#allocation2 + $0x100] sm:$0xff] %vm272, 0.0
        %306 = vst.msk [vmem:[#allocation2 + $0x108] sm:$0xff] %vm272, 0.0
        %307 = vst.msk [vmem:[#allocation2 + $0x110] sm:$0xff] %vm272, 0.0
        %308 = vst.msk [vmem:[#allocation2 + $0x118] sm:$0xff] %vm272, 0.0
        %309 = vst.msk [vmem:[#allocation2 + $0x120] sm:$0xff] %vm272, 0.0
        %310 = vst.msk [vmem:[#allocation2 + $0x128] sm:$0xff] %vm272, 0.0
        %311 = vst.msk [vmem:[#allocation2 + $0x130] sm:$0xff] %vm272, 0.0
        %312 = vst.msk [vmem:[#allocation2 + $0x138] sm:$0xff] %vm272, 0.0
        %313 = vst.msk [vmem:[#allocation2 + $0x140] sm:$0xff] %vm272, 0.0
        %314 = vst.msk [vmem:[#allocation2 + $0x148] sm:$0xff] %vm272, 0.0
        %315 = vst.msk [vmem:[#allocation2 + $0x150] sm:$0xff] %vm272, 0.0
        %316 = vst.msk [vmem:[#allocation2 + $0x158] sm:$0xff] %vm272, 0.0
        %317 = vst.msk [vmem:[#allocation2 + $0x160] sm:$0xff] %vm272, 0.0
        %318 = vst.msk [vmem:[#allocation2 + $0x168] sm:$0xff] %vm272, 0.0
        %319 = vst.msk [vmem:[#allocation2 + $0x170] sm:$0xff] %vm272, 0.0
        %320 = vst.msk [vmem:[#allocation2 + $0x178] sm:$0xff] %vm272, 0.0
        %321 = vst.msk [vmem:[#allocation2 + $0x180] sm:$0xff] %vm272, 0.0
        %322 = vst.msk [vmem:[#allocation2 + $0x188] sm:$0xff] %vm272, 0.0
        %323 = vst.msk [vmem:[#allocation2 + $0x190] sm:$0xff] %vm272, 0.0
        %324 = vst.msk [vmem:[#allocation2 + $0x198] sm:$0xff] %vm272, 0.0
        %325 = vst.msk [vmem:[#allocation2 + $0x1a0] sm:$0xff] %vm272, 0.0
        %326 = vst.msk [vmem:[#allocation2 + $0x1a8] sm:$0xff] %vm272, 0.0
        %327 = vst.msk [vmem:[#allocation2 + $0x1b0] sm:$0xff] %vm272, 0.0
        %328 = vst.msk [vmem:[#allocation2 + $0x1b8] sm:$0xff] %vm272, 0.0
        %329 = vst.msk [vmem:[#allocation2 + $0x1c0] sm:$0xff] %vm272, 0.0
        %330 = vst.msk [vmem:[#allocation2 + $0x1c8] sm:$0xff] %vm272, 0.0
        %331 = vst.msk [vmem:[#allocation2 + $0x1d0] sm:$0xff] %vm272, 0.0
        %332 = vst.msk [vmem:[#allocation2 + $0x1d8] sm:$0xff] %vm272, 0.0
        %333 = vst.msk [vmem:[#allocation2 + $0x1e0] sm:$0xff] %vm272, 0.0
        %334 = vst.msk [vmem:[#allocation2 + $0x1e8] sm:$0xff] %vm272, 0.0
        %335 = vst.msk [vmem:[#allocation2 + $0x1f0] sm:$0xff] %vm272, 0.0
        %336 = vst.msk [vmem:[#allocation2 + $0x1f8] sm:$0xff] %vm272, 0.0
      $region36: #{conv_bn.1} parent=31 // pred_fallthru
        _
      %v337 = vld [vmem:[#allocation2] sm:$0xff]
      %v338 = vld [vmem:[#allocation2 + $0x8] sm:$0xff]
      %v339 = vld [vmem:[#allocation2 + $0x10] sm:$0xff]
      %v340 = vld [vmem:[#allocation2 + $0x18] sm:$0xff]
      %v341 = vld [vmem:[#allocation2 + $0x20] sm:$0xff]
      %v342 = vld [vmem:[#allocation2 + $0x28] sm:$0xff]
      %v343 = vld [vmem:[#allocation2 + $0x30] sm:$0xff]
      %v344 = vld [vmem:[#allocation2 + $0x38] sm:$0xff]
      %v345 = vld [vmem:[#allocation2 + $0x40] sm:$0xff]
      %v346 = vld [vmem:[#allocation2 + $0x48] sm:$0xff]
      %v347 = vld [vmem:[#allocation2 + $0x50] sm:$0xff]
      %v348 = vld [vmem:[#allocation2 + $0x58] sm:$0xff]
      %v349 = vld [vmem:[#allocation2 + $0x60] sm:$0xff]
      %v350 = vld [vmem:[#allocation2 + $0x68] sm:$0xff]
      %v351 = vld [vmem:[#allocation2 + $0x70] sm:$0xff]
      %v352 = vld [vmem:[#allocation2 + $0x78] sm:$0xff]
      %v353 = vld [vmem:[#allocation2 + $0x80] sm:$0xff]
      %v354 = vld [vmem:[#allocation2 + $0x88] sm:$0xff]
      %v355 = vld [vmem:[#allocation2 + $0x90] sm:$0xff]
      %v356 = vld [vmem:[#allocation2 + $0x98] sm:$0xff]
      %v357 = vld [vmem:[#allocation2 + $0xa0] sm:$0xff]
      %v358 = vld [vmem:[#allocation2 + $0xa8] sm:$0xff]
      %v359 = vld [vmem:[#allocation2 + $0xb0] sm:$0xff]
      %v360 = vld [vmem:[#allocation2 + $0xb8] sm:$0xff]
      %v361 = vld [vmem:[#allocation2 + $0xc0] sm:$0xff]
      %v362 = vld [vmem:[#allocation2 + $0xc8] sm:$0xff]
      %v363 = vld [vmem:[#allocation2 + $0xd0] sm:$0xff]
      %v364 = vld [vmem:[#allocation2 + $0xd8] sm:$0xff]
      %v365 = vld [vmem:[#allocation2 + $0xe0] sm:$0xff]
      %v366 = vld [vmem:[#allocation2 + $0xe8] sm:$0xff]
      %v367 = vld [vmem:[#allocation2 + $0xf0] sm:$0xff]
      %v368 = vld [vmem:[#allocation2 + $0xf8] sm:$0xff]
      %v369 = vld [vmem:[#allocation2 + $0x100] sm:$0xff]
      %v370 = vld [vmem:[#allocation2 + $0x108] sm:$0xff]
      %v371 = vld [vmem:[#allocation2 + $0x110] sm:$0xff]
      %v372 = vld [vmem:[#allocation2 + $0x118] sm:$0xff]
      %v373 = vld [vmem:[#allocation2 + $0x120] sm:$0xff]
      %v374 = vld [vmem:[#allocation2 + $0x128] sm:$0xff]
      %v375 = vld [vmem:[#allocation2 + $0x130] sm:$0xff]
      %v376 = vld [vmem:[#allocation2 + $0x138] sm:$0xff]
      %v377 = vld [vmem:[#allocation2 + $0x140] sm:$0xff]
      %v378 = vld [vmem:[#allocation2 + $0x148] sm:$0xff]
      %v379 = vld [vmem:[#allocation2 + $0x150] sm:$0xff]
      %v380 = vld [vmem:[#allocation2 + $0x158] sm:$0xff]
      %v381 = vld [vmem:[#allocation2 + $0x160] sm:$0xff]
      %v382 = vld [vmem:[#allocation2 + $0x168] sm:$0xff]
      %v383 = vld [vmem:[#allocation2 + $0x170] sm:$0xff]
      %v384 = vld [vmem:[#allocation2 + $0x178] sm:$0xff]
      %v385 = vld [vmem:[#allocation2 + $0x180] sm:$0xff]
      %v386 = vld [vmem:[#allocation2 + $0x188] sm:$0xff]
      %v387 = vld [vmem:[#allocation2 + $0x190] sm:$0xff]
      %v388 = vld [vmem:[#allocation2 + $0x198] sm:$0xff]
      %v389 = vld [vmem:[#allocation2 + $0x1a0] sm:$0xff]
      %v390 = vld [vmem:[#allocation2 + $0x1a8] sm:$0xff]
      %v391 = vld [vmem:[#allocation2 + $0x1b0] sm:$0xff]
      %v392 = vld [vmem:[#allocation2 + $0x1b8] sm:$0xff]
      %v393 = vld [vmem:[#allocation2 + $0x1c0] sm:$0xff]
      %v394 = vld [vmem:[#allocation2 + $0x1c8] sm:$0xff]
      %v395 = vld [vmem:[#allocation2 + $0x1d0] sm:$0xff]
      %v396 = vld [vmem:[#allocation2 + $0x1d8] sm:$0xff]
      %v397 = vld [vmem:[#allocation2 + $0x1e0] sm:$0xff]
      %v398 = vld [vmem:[#allocation2 + $0x1e8] sm:$0xff]
      %v399 = vld [vmem:[#allocation2 + $0x1f0] sm:$0xff]
      %v400 = vld [vmem:[#allocation2 + $0x1f8] sm:$0xff]
      %v401 = vld [vmem:[%s243] sm:$0xff]
      %v402 = vld [vmem:[%s243 + $0x8] sm:$0xff]
      %v403 = vld [vmem:[%s243 + $0x10] sm:$0xff]
      %v404 = vld [vmem:[%s243 + $0x18] sm:$0xff]
      %v405 = vld [vmem:[%s243 + $0x20] sm:$0xff]
      %v406 = vld [vmem:[%s243 + $0x28] sm:$0xff]
      %v407 = vld [vmem:[%s243 + $0x30] sm:$0xff]
      %v408 = vld [vmem:[%s243 + $0x38] sm:$0xff]
      %v409 = vld [vmem:[%s243 + $0x40] sm:$0xff]
      %v410 = vld [vmem:[%s243 + $0x48] sm:$0xff]
      %v411 = vld [vmem:[%s243 + $0x50] sm:$0xff]
      %v412 = vld [vmem:[%s243 + $0x58] sm:$0xff]
      %v413 = vld [vmem:[%s243 + $0x60] sm:$0xff]
      %v414 = vld [vmem:[%s243 + $0x68] sm:$0xff]
      %v415 = vld [vmem:[%s243 + $0x70] sm:$0xff]
      %v416 = vld [vmem:[%s243 + $0x78] sm:$0xff]
      %v417 = vld [vmem:[%s243 + $0x80] sm:$0xff]
      %v418 = vld [vmem:[%s243 + $0x88] sm:$0xff]
      %v419 = vld [vmem:[%s243 + $0x90] sm:$0xff]
      %v420 = vld [vmem:[%s243 + $0x98] sm:$0xff]
      %v421 = vld [vmem:[%s243 + $0xa0] sm:$0xff]
      %v422 = vld [vmem:[%s243 + $0xa8] sm:$0xff]
      %v423 = vld [vmem:[%s243 + $0xb0] sm:$0xff]
      %v424 = vld [vmem:[%s243 + $0xb8] sm:$0xff]
      %v425 = vld [vmem:[%s243 + $0xc0] sm:$0xff]
      %v426 = vld [vmem:[%s243 + $0xc8] sm:$0xff]
      %v427 = vld [vmem:[%s243 + $0xd0] sm:$0xff]
      %v428 = vld [vmem:[%s243 + $0xd8] sm:$0xff]
      %v429 = vld [vmem:[%s243 + $0xe0] sm:$0xff]
      %v430 = vld [vmem:[%s243 + $0xe8] sm:$0xff]
      %v431 = vld [vmem:[%s243 + $0xf0] sm:$0xff]
      %v432 = vld [vmem:[%s243 + $0xf8] sm:$0xff]
      %v433 = vld [vmem:[%s243 + $0x100] sm:$0xff]
      %v434 = vld [vmem:[%s243 + $0x108] sm:$0xff]
      %v435 = vld [vmem:[%s243 + $0x110] sm:$0xff]
      %v436 = vld [vmem:[%s243 + $0x118] sm:$0xff]
      %v437 = vld [vmem:[%s243 + $0x120] sm:$0xff]
      %v438 = vld [vmem:[%s243 + $0x128] sm:$0xff]
      %v439 = vld [vmem:[%s243 + $0x130] sm:$0xff]
      %v440 = vld [vmem:[%s243 + $0x138] sm:$0xff]
      %v441 = vld [vmem:[%s243 + $0x140] sm:$0xff]
      %v442 = vld [vmem:[%s243 + $0x148] sm:$0xff]
      %v443 = vld [vmem:[%s243 + $0x150] sm:$0xff]
      %v444 = vld [vmem:[%s243 + $0x158] sm:$0xff]
      %v445 = vld [vmem:[%s243 + $0x160] sm:$0xff]
      %v446 = vld [vmem:[%s243 + $0x168] sm:$0xff]
      %v447 = vld [vmem:[%s243 + $0x170] sm:$0xff]
      %v448 = vld [vmem:[%s243 + $0x178] sm:$0xff]
      %v449 = vld [vmem:[%s243 + $0x180] sm:$0xff]
      %v450 = vld [vmem:[%s243 + $0x188] sm:$0xff]
      %v451 = vld [vmem:[%s243 + $0x190] sm:$0xff]
      %v452 = vld [vmem:[%s243 + $0x198] sm:$0xff]
      %v453 = vld [vmem:[%s243 + $0x1a0] sm:$0xff]
      %v454 = vld [vmem:[%s243 + $0x1a8] sm:$0xff]
      %v455 = vld [vmem:[%s243 + $0x1b0] sm:$0xff]
      %v456 = vld [vmem:[%s243 + $0x1b8] sm:$0xff]
      %v457 = vld [vmem:[%s243 + $0x1c0] sm:$0xff]
      %v458 = vld [vmem:[%s243 + $0x1c8] sm:$0xff]
      %v459 = vld [vmem:[%s243 + $0x1d0] sm:$0xff]
      %v460 = vld [vmem:[%s243 + $0x1d8] sm:$0xff]
      %v461 = vld [vmem:[%s243 + $0x1e0] sm:$0xff]
      %v462 = vld [vmem:[%s243 + $0x1e8] sm:$0xff]
      %v463 = vld [vmem:[%s243 + $0x1f0] sm:$0xff]
      %v464 = vld [vmem:[%s243 + $0x1f8] sm:$0xff]
      %v465 = vld [vmem:[%s253] sm:$0xf]
      %v466 = vld [vmem:[%s253 + $0x4] sm:$0xf]
      %v467 = vld [vmem:[%s253 + $0x8] sm:$0xf]
      %v468 = vld [vmem:[%s253 + $0xc] sm:$0xf]
      %v469 = vld [vmem:[%s253 + $0x10] sm:$0xf]
      %v470 = vld [vmem:[%s253 + $0x14] sm:$0xf]
      %v471 = vld [vmem:[%s253 + $0x18] sm:$0xf]
      %v472 = vld [vmem:[%s253 + $0x1c] sm:$0xf]
      %v473 = vld [vmem:[%s253 + $0x20] sm:$0xf]
      %v474 = vld [vmem:[%s253 + $0x24] sm:$0xf]
      %v475 = vld [vmem:[%s253 + $0x28] sm:$0xf]
      %v476 = vld [vmem:[%s253 + $0x2c] sm:$0xf]
      %v477 = vld [vmem:[%s253 + $0x30] sm:$0xf]
      %v478 = vld [vmem:[%s253 + $0x34] sm:$0xf]
      %v479 = vld [vmem:[%s253 + $0x38] sm:$0xf]
      %v480 = vld [vmem:[%s253 + $0x3c] sm:$0xf]
      %v481 = vld [vmem:[%s253 + $0x40] sm:$0xf]
      %v482 = vld [vmem:[%s253 + $0x44] sm:$0xf]
      %v483 = vld [vmem:[%s253 + $0x48] sm:$0xf]
      %v484 = vld [vmem:[%s253 + $0x4c] sm:$0xf]
      %v485 = vld [vmem:[%s253 + $0x50] sm:$0xf]
      %v486 = vld [vmem:[%s253 + $0x54] sm:$0xf]
      %v487 = vld [vmem:[%s253 + $0x58] sm:$0xf]
      %v488 = vld [vmem:[%s253 + $0x5c] sm:$0xf]
      %v489 = vld [vmem:[%s253 + $0x60] sm:$0xf]
      %v490 = vld [vmem:[%s253 + $0x64] sm:$0xf]
      %v491 = vld [vmem:[%s253 + $0x68] sm:$0xf]
      %v492 = vld [vmem:[%s253 + $0x6c] sm:$0xf]
      %v493 = vld [vmem:[%s253 + $0x70] sm:$0xf]
      %v494 = vld [vmem:[%s253 + $0x74] sm:$0xf]
      %v495 = vld [vmem:[%s253 + $0x78] sm:$0xf]
      %v496 = vld [vmem:[%s253 + $0x7c] sm:$0xf]
      %v561 = vunpack.c.l.b16 %v401
      %v562 = vunpack.c.h.b16 %v401
      %v563 = vunpack.c.l.b16 %v402
      %v564 = vunpack.c.h.b16 %v402
      %v565 = vunpack.c.l.b16 %v403
      %v566 = vunpack.c.h.b16 %v403
      %v567 = vunpack.c.l.b16 %v404
      %v568 = vunpack.c.h.b16 %v404
      %v569 = vunpack.c.l.b16 %v405
      %v570 = vunpack.c.h.b16 %v405
      %v571 = vunpack.c.l.b16 %v406
      %v572 = vunpack.c.h.b16 %v406
      %v573 = vunpack.c.l.b16 %v407
      %v574 = vunpack.c.h.b16 %v407
      %v575 = vunpack.c.l.b16 %v408
      %v576 = vunpack.c.h.b16 %v408
      %v577 = vunpack.c.l.b16 %v409
      %v578 = vunpack.c.h.b16 %v409
      %v579 = vunpack.c.l.b16 %v410
      %v580 = vunpack.c.h.b16 %v410
      %v581 = vunpack.c.l.b16 %v411
      %v582 = vunpack.c.h.b16 %v411
      %v583 = vunpack.c.l.b16 %v412
      %v584 = vunpack.c.h.b16 %v412
      %v585 = vunpack.c.l.b16 %v413
      %v586 = vunpack.c.h.b16 %v413
      %v587 = vunpack.c.l.b16 %v414
      %v588 = vunpack.c.h.b16 %v414
      %v589 = vunpack.c.l.b16 %v415
      %v590 = vunpack.c.h.b16 %v415
      %v591 = vunpack.c.l.b16 %v416
      %v592 = vunpack.c.h.b16 %v416
      %v593 = vunpack.c.l.b16 %v417
      %v594 = vunpack.c.h.b16 %v417
      %v595 = vunpack.c.l.b16 %v418
      %v596 = vunpack.c.h.b16 %v418
      %v597 = vunpack.c.l.b16 %v419
      %v598 = vunpack.c.h.b16 %v419
      %v599 = vunpack.c.l.b16 %v420
      %v600 = vunpack.c.h.b16 %v420
      %v601 = vunpack.c.l.b16 %v421
      %v602 = vunpack.c.h.b16 %v421
      %v603 = vunpack.c.l.b16 %v422
      %v604 = vunpack.c.h.b16 %v422
      %v605 = vunpack.c.l.b16 %v423
      %v606 = vunpack.c.h.b16 %v423
      %v607 = vunpack.c.l.b16 %v424
      %v608 = vunpack.c.h.b16 %v424
      %v609 = vunpack.c.l.b16 %v425
      %v610 = vunpack.c.h.b16 %v425
      %v611 = vunpack.c.l.b16 %v426
      %v612 = vunpack.c.h.b16 %v426
      %v613 = vunpack.c.l.b16 %v427
      %v614 = vunpack.c.h.b16 %v427
      %v615 = vunpack.c.l.b16 %v428
      %v616 = vunpack.c.h.b16 %v428
      %v617 = vunpack.c.l.b16 %v429
      %v618 = vunpack.c.h.b16 %v429
      %v619 = vunpack.c.l.b16 %v430
      %v620 = vunpack.c.h.b16 %v430
      %v621 = vunpack.c.l.b16 %v431
      %v622 = vunpack.c.h.b16 %v431
      %v623 = vunpack.c.l.b16 %v432
      %v624 = vunpack.c.h.b16 %v432
      %v625 = vunpack.c.l.b16 %v433
      %v626 = vunpack.c.h.b16 %v433
      %v627 = vunpack.c.l.b16 %v434
      %v628 = vunpack.c.h.b16 %v434
      %v629 = vunpack.c.l.b16 %v435
      %v630 = vunpack.c.h.b16 %v435
      %v631 = vunpack.c.l.b16 %v436
      %v632 = vunpack.c.h.b16 %v436
      %v633 = vunpack.c.l.b16 %v437
      %v634 = vunpack.c.h.b16 %v437
      %v635 = vunpack.c.l.b16 %v438
      %v636 = vunpack.c.h.b16 %v438
      %v637 = vunpack.c.l.b16 %v439
      %v638 = vunpack.c.h.b16 %v439
      %v639 = vunpack.c.l.b16 %v440
      %v640 = vunpack.c.h.b16 %v440
      %v641 = vunpack.c.l.b16 %v441
      %v642 = vunpack.c.h.b16 %v441
      %v643 = vunpack.c.l.b16 %v442
      %v644 = vunpack.c.h.b16 %v442
      %v645 = vunpack.c.l.b16 %v443
      %v646 = vunpack.c.h.b16 %v443
      %v647 = vunpack.c.l.b16 %v444
      %v648 = vunpack.c.h.b16 %v444
      %v649 = vunpack.c.l.b16 %v445
      %v650 = vunpack.c.h.b16 %v445
      %v651 = vunpack.c.l.b16 %v446
      %v652 = vunpack.c.h.b16 %v446
      %v653 = vunpack.c.l.b16 %v447
      %v654 = vunpack.c.h.b16 %v447
      %v655 = vunpack.c.l.b16 %v448
      %v656 = vunpack.c.h.b16 %v448
      %v657 = vunpack.c.l.b16 %v449
      %v658 = vunpack.c.h.b16 %v449
      %v659 = vunpack.c.l.b16 %v450
      %v660 = vunpack.c.h.b16 %v450
      %v661 = vunpack.c.l.b16 %v451
      %v662 = vunpack.c.h.b16 %v451
      %v663 = vunpack.c.l.b16 %v452
      %v664 = vunpack.c.h.b16 %v452
      %v665 = vunpack.c.l.b16 %v453
      %v666 = vunpack.c.h.b16 %v453
      %v667 = vunpack.c.l.b16 %v454
      %v668 = vunpack.c.h.b16 %v454
      %v669 = vunpack.c.l.b16 %v455
      %v670 = vunpack.c.h.b16 %v455
      %v671 = vunpack.c.l.b16 %v456
      %v672 = vunpack.c.h.b16 %v456
      %v673 = vunpack.c.l.b16 %v457
      %v674 = vunpack.c.h.b16 %v457
      %v675 = vunpack.c.l.b16 %v458
      %v676 = vunpack.c.h.b16 %v458
      %v677 = vunpack.c.l.b16 %v459
      %v678 = vunpack.c.h.b16 %v459
      %v679 = vunpack.c.l.b16 %v460
      %v680 = vunpack.c.h.b16 %v460
      %v681 = vunpack.c.l.b16 %v461
      %v682 = vunpack.c.h.b16 %v461
      %v683 = vunpack.c.l.b16 %v462
      %v684 = vunpack.c.h.b16 %v462
      %v685 = vunpack.c.l.b16 %v463
      %v686 = vunpack.c.h.b16 %v463
      %v687 = vunpack.c.l.b16 %v464
      %v688 = vunpack.c.h.b16 %v464
      %v689 = vpack.c.b16 %v563, %v561
      %v690 = vpack.c.b16 %v564, %v562
      %v691 = vpack.c.b16 %v567, %v565
      %v692 = vpack.c.b16 %v568, %v566
      %v693 = vpack.c.b16 %v571, %v569
      %v694 = vpack.c.b16 %v572, %v570
      %v695 = vpack.c.b16 %v575, %v573
      %v696 = vpack.c.b16 %v576, %v574
      %v697 = vpack.c.b16 %v579, %v577
      %v698 = vpack.c.b16 %v580, %v578
      %v699 = vpack.c.b16 %v583, %v581
      %v700 = vpack.c.b16 %v584, %v582
      %v701 = vpack.c.b16 %v587, %v585
      %v702 = vpack.c.b16 %v588, %v586
      %v703 = vpack.c.b16 %v591, %v589
      %v704 = vpack.c.b16 %v592, %v590
      %v705 = vpack.c.b16 %v595, %v593
      %v706 = vpack.c.b16 %v596, %v594
      %v707 = vpack.c.b16 %v599, %v597
      %v708 = vpack.c.b16 %v600, %v598
      %v709 = vpack.c.b16 %v603, %v601
      %v710 = vpack.c.b16 %v604, %v602
      %v711 = vpack.c.b16 %v607, %v605
      %v712 = vpack.c.b16 %v608, %v606
      %v713 = vpack.c.b16 %v611, %v609
      %v714 = vpack.c.b16 %v612, %v610
      %v715 = vpack.c.b16 %v615, %v613
      %v716 = vpack.c.b16 %v616, %v614
      %v717 = vpack.c.b16 %v619, %v617
      %v718 = vpack.c.b16 %v620, %v618
      %v719 = vpack.c.b16 %v623, %v621
      %v720 = vpack.c.b16 %v624, %v622
      %v721 = vpack.c.b16 %v627, %v625
      %v722 = vpack.c.b16 %v628, %v626
      %v723 = vpack.c.b16 %v631, %v629
      %v724 = vpack.c.b16 %v632, %v630
      %v725 = vpack.c.b16 %v635, %v633
      %v726 = vpack.c.b16 %v636, %v634
      %v727 = vpack.c.b16 %v639, %v637
      %v728 = vpack.c.b16 %v640, %v638
      %v729 = vpack.c.b16 %v643, %v641
      %v730 = vpack.c.b16 %v644, %v642
      %v731 = vpack.c.b16 %v647, %v645
      %v732 = vpack.c.b16 %v648, %v646
      %v733 = vpack.c.b16 %v651, %v649
      %v734 = vpack.c.b16 %v652, %v650
      %v735 = vpack.c.b16 %v655, %v653
      %v736 = vpack.c.b16 %v656, %v654
      %v737 = vpack.c.b16 %v659, %v657
      %v738 = vpack.c.b16 %v660, %v658
      %v739 = vpack.c.b16 %v663, %v661
      %v740 = vpack.c.b16 %v664, %v662
      %v741 = vpack.c.b16 %v667, %v665
      %v742 = vpack.c.b16 %v668, %v666
      %v743 = vpack.c.b16 %v671, %v669
      %v744 = vpack.c.b16 %v672, %v670
      %v745 = vpack.c.b16 %v675, %v673
      %v746 = vpack.c.b16 %v676, %v674
      %v747 = vpack.c.b16 %v679, %v677
      %v748 = vpack.c.b16 %v680, %v678
      %v749 = vpack.c.b16 %v683, %v681
      %v750 = vpack.c.b16 %v684, %v682
      %v751 = vpack.c.b16 %v687, %v685
      %v752 = vpack.c.b16 %v688, %v686
      %v849 = vunpack.c.l.b16 %v465
      %v850 = vunpack.c.l.b16 %v466
      %v851 = vunpack.c.l.b16 %v467
      %v852 = vunpack.c.l.b16 %v468
      %v853 = vunpack.c.l.b16 %v469
      %v854 = vunpack.c.l.b16 %v470
      %v855 = vunpack.c.l.b16 %v471
      %v856 = vunpack.c.l.b16 %v472
      %v857 = vunpack.c.l.b16 %v473
      %v858 = vunpack.c.l.b16 %v474
      %v859 = vunpack.c.l.b16 %v475
      %v860 = vunpack.c.l.b16 %v476
      %v861 = vunpack.c.l.b16 %v477
      %v862 = vunpack.c.l.b16 %v478
      %v863 = vunpack.c.l.b16 %v479
      %v864 = vunpack.c.l.b16 %v480
      %v865 = vunpack.c.l.b16 %v481
      %v866 = vunpack.c.l.b16 %v482
      %v867 = vunpack.c.l.b16 %v483
      %v868 = vunpack.c.l.b16 %v484
      %v869 = vunpack.c.l.b16 %v485
      %v870 = vunpack.c.l.b16 %v486
      %v871 = vunpack.c.l.b16 %v487
      %v872 = vunpack.c.l.b16 %v488
      %v873 = vunpack.c.l.b16 %v489
      %v874 = vunpack.c.l.b16 %v490
      %v875 = vunpack.c.l.b16 %v491
      %v876 = vunpack.c.l.b16 %v492
      %v877 = vunpack.c.l.b16 %v493
      %v878 = vunpack.c.l.b16 %v494
      %v879 = vunpack.c.l.b16 %v495
      %v880 = vunpack.c.l.b16 %v496
      %v881 = vpack.c.b16 %v850, %v849
      %v882 = vpack.c.b16 %v852, %v851
      %v883 = vpack.c.b16 %v854, %v853
      %v884 = vpack.c.b16 %v856, %v855
      %v885 = vpack.c.b16 %v858, %v857
      %v886 = vpack.c.b16 %v860, %v859
      %v887 = vpack.c.b16 %v862, %v861
      %v888 = vpack.c.b16 %v864, %v863
      %v889 = vpack.c.b16 %v866, %v865
      %v890 = vpack.c.b16 %v868, %v867
      %v891 = vpack.c.b16 %v870, %v869
      %v892 = vpack.c.b16 %v872, %v871
      %v893 = vpack.c.b16 %v874, %v873
      %v894 = vpack.c.b16 %v876, %v875
      %v895 = vpack.c.b16 %v878, %v877
      %v896 = vpack.c.b16 %v880, %v879
      %913 = vmatprep.subr.bf16.mxu0 0
      %914 = vmatpush1.bf16.msra.mxu0 %v881
      %915 = vmatprep.subr.bf16.mxu0 0
      %916 = vmatpush1.bf16.msra.mxu0 %v882
      %917 = vmatprep.subr.bf16.mxu0 0
      %918 = vmatpush1.bf16.msra.mxu0 %v883
      %919 = vmatprep.subr.bf16.mxu0 0
      %920 = vmatpush1.bf16.msra.mxu0 %v884
      %921 = vmatprep.subr.bf16.mxu0 0
      %922 = vmatpush1.bf16.msra.mxu0 %v885
      %923 = vmatprep.subr.bf16.mxu0 0
      %924 = vmatpush1.bf16.msra.mxu0 %v886
      %925 = vmatprep.subr.bf16.mxu0 0
      %926 = vmatpush1.bf16.msra.mxu0 %v887
      %927 = vmatprep.subr.bf16.mxu0 0
      %928 = vmatpush1.bf16.msra.mxu0 %v888
      %929 = vmatprep.subr.bf16.mxu0 0
      %930 = vmatpush1.bf16.msra.mxu0 %v889
      %931 = vmatprep.subr.bf16.mxu0 0
      %932 = vmatpush1.bf16.msra.mxu0 %v890
      %933 = vmatprep.subr.bf16.mxu0 0
      %934 = vmatpush1.bf16.msra.mxu0 %v891
      %935 = vmatprep.subr.bf16.mxu0 0
      %936 = vmatpush1.bf16.msra.mxu0 %v892
      %937 = vmatprep.subr.bf16.mxu0 0
      %938 = vmatpush1.bf16.msra.mxu0 %v893
      %939 = vmatprep.subr.bf16.mxu0 0
      %940 = vmatpush1.bf16.msra.mxu0 %v894
      %941 = vmatprep.subr.bf16.mxu0 0
      %942 = vmatpush1.bf16.msra.mxu0 %v895
      %943 = vmatprep.subr.bf16.mxu0 0
      %944 = vmatpush1.bf16.msra.mxu0 %v896
      %945 = vmatprep.mubr.bf16.mxu0 %v690
      %946 = vmatmul.mubr.bf16.gmra.mrb[0].mxu0 %v689
      %v947 = vpop.f32.mrb[0].mxu0
      %v948 = vadd.f32 0.0, %v947
      %v949 = vpop.f32.mrb[0].mxu0
      %v950 = vpop.f32.mrb[0].mxu0
      %v951 = vadd.f32 0.0, %v950
      %v952 = vpop.f32.mrb[0].mxu0
      %953 = vmatprep.mubr.bf16.mxu0 %v692
      %954 = vmatmul.mubr.bf16.gmra.mrb[0].mxu0 %v691
      %v955 = vpop.f32.mrb[0].mxu0
      %v956 = vadd.f32 0.0, %v955
      %v957 = vpop.f32.mrb[0].mxu0
      %v958 = vpop.f32.mrb[0].mxu0
      %v959 = vadd.f32 0.0, %v958
      %v960 = vpop.f32.mrb[0].mxu0
      %961 = vmatprep.mubr.bf16.mxu0 %v694
      %962 = vmatmul.mubr.bf16.gmra.mrb[0].mxu0 %v693
      %v963 = vpop.f32.mrb[0].mxu0
      %v964 = vadd.f32 0.0, %v963
      %v965 = vpop.f32.mrb[0].mxu0
      %v966 = vpop.f32.mrb[0].mxu0
      %v967 = vadd.f32 0.0, %v966
      %v968 = vpop.f32.mrb[0].mxu0
      %969 = vmatprep.mubr.bf16.mxu0 %v696
      %970 = vmatmul.mubr.bf16.gmra.mrb[0].mxu0 %v695
      %v971 = vpop.f32.mrb[0].mxu0
      %v972 = vadd.f32 0.0, %v971
      %v973 = vpop.f32.mrb[0].mxu0
      %v974 = vpop.f32.mrb[0].mxu0
      %v975 = vadd.f32 0.0, %v974
      %v976 = vpop.f32.mrb[0].mxu0
      %977 = vmatprep.mubr.bf16.mxu0 %v698
      %978 = vmatmul.mubr.bf16.gmra.mrb[0].mxu0 %v697
      %v979 = vpop.f32.mrb[0].mxu0
      %v980 = vadd.f32 0.0, %v979
      %v981 = vpop.f32.mrb[0].mxu0
      %v982 = vpop.f32.mrb[0].mxu0
      %v983 = vadd.f32 0.0, %v982
      %v984 = vpop.f32.mrb[0].mxu0
      %985 = vmatprep.mubr.bf16.mxu0 %v700
      %986 = vmatmul.mubr.bf16.gmra.mrb[0].mxu0 %v699
      %v987 = vpop.f32.mrb[0].mxu0
      %v988 = vadd.f32 0.0, %v987
      %v989 = vpop.f32.mrb[0].mxu0
      %v990 = vpop.f32.mrb[0].mxu0
      %v991 = vadd.f32 0.0, %v990
      %v992 = vpop.f32.mrb[0].mxu0
      %993 = vmatprep.mubr.bf16.mxu0 %v702
      %994 = vmatmul.mubr.bf16.gmra.mrb[0].mxu0 %v701
      %v995 = vpop.f32.mrb[0].mxu0
      %v996 = vadd.f32 0.0, %v995
      %v997 = vpop.f32.mrb[0].mxu0
      %v998 = vpop.f32.mrb[0].mxu0
      %v999 = vadd.f32 0.0, %v998
      %v1000 = vpop.f32.mrb[0].mxu0
      %1001 = vmatprep.mubr.bf16.mxu0 %v704
      %1002 = vmatmul.mubr.bf16.gmra.mrb[0].mxu0 %v703
      %v1003 = vpop.f32.mrb[0].mxu0
      %v1004 = vadd.f32 0.0, %v1003
      %v1005 = vpop.f32.mrb[0].mxu0
      %v1006 = vpop.f32.mrb[0].mxu0
      %v1007 = vadd.f32 0.0, %v1006
      %v1008 = vpop.f32.mrb[0].mxu0
      %1009 = vmatprep.mubr.bf16.mxu0 %v706
      %1010 = vmatmul.mubr.bf16.gmra.mrb[0].mxu0 %v705
      %v1011 = vpop.f32.mrb[0].mxu0
      %v1012 = vadd.f32 0.0, %v1011
      %v1013 = vpop.f32.mrb[0].mxu0
      %v1014 = vpop.f32.mrb[0].mxu0
      %v1015 = vadd.f32 0.0, %v1014
      %v1016 = vpop.f32.mrb[0].mxu0
      %1017 = vmatprep.mubr.bf16.mxu0 %v708
      %1018 = vmatmul.mubr.bf16.gmra.mrb[0].mxu0 %v707
      %v1019 = vpop.f32.mrb[0].mxu0
      %v1020 = vadd.f32 0.0, %v1019
      %v1021 = vpop.f32.mrb[0].mxu0
      %v1022 = vpop.f32.mrb[0].mxu0
      %v1023 = vadd.f32 0.0, %v1022
      %v1024 = vpop.f32.mrb[0].mxu0
      %1025 = vmatprep.mubr.bf16.mxu0 %v710
      %1026 = vmatmul.mubr.bf16.gmra.mrb[0].mxu0 %v709
      %v1027 = vpop.f32.mrb[0].mxu0
      %v1028 = vadd.f32 0.0, %v1027
      %v1029 = vpop.f32.mrb[0].mxu0
      %v1030 = vpop.f32.mrb[0].mxu0
      %v1031 = vadd.f32 0.0, %v1030
      %v1032 = vpop.f32.mrb[0].mxu0
      %1033 = vmatprep.mubr.bf16.mxu0 %v712
      %1034 = vmatmul.mubr.bf16.gmra.mrb[0].mxu0 %v711
      %v1035 = vpop.f32.mrb[0].mxu0
      %v1036 = vadd.f32 0.0, %v1035
      %v1037 = vpop.f32.mrb[0].mxu0
      %v1038 = vpop.f32.mrb[0].mxu0
      %v1039 = vadd.f32 0.0, %v1038
      %v1040 = vpop.f32.mrb[0].mxu0
      %1041 = vmatprep.mubr.bf16.mxu0 %v714
      %1042 = vmatmul.mubr.bf16.gmra.mrb[0].mxu0 %v713
      %v1043 = vpop.f32.mrb[0].mxu0
      %v1044 = vadd.f32 0.0, %v1043
      %v1045 = vpop.f32.mrb[0].mxu0
      %v1046 = vpop.f32.mrb[0].mxu0
      %v1047 = vadd.f32 0.0, %v1046
      %v1048 = vpop.f32.mrb[0].mxu0
      %1049 = vmatprep.mubr.bf16.mxu0 %v716
      %1050 = vmatmul.mubr.bf16.gmra.mrb[0].mxu0 %v715
      %v1051 = vpop.f32.mrb[0].mxu0
      %v1052 = vadd.f32 0.0, %v1051
      %v1053 = vpop.f32.mrb[0].mxu0
      %v1054 = vpop.f32.mrb[0].mxu0
      %v1055 = vadd.f32 0.0, %v1054
      %v1056 = vpop.f32.mrb[0].mxu0
      %1057 = vmatprep.mubr.bf16.mxu0 %v718
      %1058 = vmatmul.mubr.bf16.gmra.mrb[0].mxu0 %v717
      %v1059 = vpop.f32.mrb[0].mxu0
      %v1060 = vadd.f32 0.0, %v1059
      %v1061 = vpop.f32.mrb[0].mxu0
      %v1062 = vpop.f32.mrb[0].mxu0
      %v1063 = vadd.f32 0.0, %v1062
      %v1064 = vpop.f32.mrb[0].mxu0
      %1065 = vmatprep.mubr.bf16.mxu0 %v720
      %1066 = vmatmul.mubr.bf16.gmra.mrb[0].mxu0 %v719
      %v1067 = vpop.f32.mrb[0].mxu0
      %v1068 = vadd.f32 0.0, %v1067
      %v1069 = vpop.f32.mrb[0].mxu0
      %v1070 = vpop.f32.mrb[0].mxu0
      %v1071 = vadd.f32 0.0, %v1070
      %v1072 = vpop.f32.mrb[0].mxu0
      %1073 = vmatprep.mubr.bf16.mxu0 %v722
      %1074 = vmatmul.mubr.bf16.gmra.mrb[0].mxu0 %v721
      %v1075 = vpop.f32.mrb[0].mxu0
      %v1076 = vadd.f32 0.0, %v1075
      %v1077 = vpop.f32.mrb[0].mxu0
      %v1078 = vpop.f32.mrb[0].mxu0
      %v1079 = vadd.f32 0.0, %v1078
      %v1080 = vpop.f32.mrb[0].mxu0
      %1081 = vmatprep.mubr.bf16.mxu0 %v724
      %1082 = vmatmul.mubr.bf16.gmra.mrb[0].mxu0 %v723
      %v1083 = vpop.f32.mrb[0].mxu0
      %v1084 = vadd.f32 0.0, %v1083
      %v1085 = vpop.f32.mrb[0].mxu0
      %v1086 = vpop.f32.mrb[0].mxu0
      %v1087 = vadd.f32 0.0, %v1086
      %v1088 = vpop.f32.mrb[0].mxu0
      %1089 = vmatprep.mubr.bf16.mxu0 %v726
      %1090 = vmatmul.mubr.bf16.gmra.mrb[0].mxu0 %v725
      %v1091 = vpop.f32.mrb[0].mxu0
      %v1092 = vadd.f32 0.0, %v1091
      %v1093 = vpop.f32.mrb[0].mxu0
      %v1094 = vpop.f32.mrb[0].mxu0
      %v1095 = vadd.f32 0.0, %v1094
      %v1096 = vpop.f32.mrb[0].mxu0
      %1097 = vmatprep.mubr.bf16.mxu0 %v728
      %1098 = vmatmul.mubr.bf16.gmra.mrb[0].mxu0 %v727
      %v1099 = vpop.f32.mrb[0].mxu0
      %v1100 = vadd.f32 0.0, %v1099
      %v1101 = vpop.f32.mrb[0].mxu0
      %v1102 = vpop.f32.mrb[0].mxu0
      %v1103 = vadd.f32 0.0, %v1102
      %v1104 = vpop.f32.mrb[0].mxu0
      %1105 = vmatprep.mubr.bf16.mxu0 %v730
      %1106 = vmatmul.mubr.bf16.gmra.mrb[0].mxu0 %v729
      %v1107 = vpop.f32.mrb[0].mxu0
      %v1108 = vadd.f32 0.0, %v1107
      %v1109 = vpop.f32.mrb[0].mxu0
      %v1110 = vpop.f32.mrb[0].mxu0
      %v1111 = vadd.f32 0.0, %v1110
      %v1112 = vpop.f32.mrb[0].mxu0
      %1113 = vmatprep.mubr.bf16.mxu0 %v732
      %1114 = vmatmul.mubr.bf16.gmra.mrb[0].mxu0 %v731
      %v1115 = vpop.f32.mrb[0].mxu0
      %v1116 = vadd.f32 0.0, %v1115
      %v1117 = vpop.f32.mrb[0].mxu0
      %v1118 = vpop.f32.mrb[0].mxu0
      %v1119 = vadd.f32 0.0, %v1118
      %v1120 = vpop.f32.mrb[0].mxu0
      %1121 = vmatprep.mubr.bf16.mxu0 %v734
      %1122 = vmatmul.mubr.bf16.gmra.mrb[0].mxu0 %v733
      %v1123 = vpop.f32.mrb[0].mxu0
      %v1124 = vadd.f32 0.0, %v1123
      %v1125 = vpop.f32.mrb[0].mxu0
      %v1126 = vpop.f32.mrb[0].mxu0
      %v1127 = vadd.f32 0.0, %v1126
      %v1128 = vpop.f32.mrb[0].mxu0
      %1129 = vmatprep.mubr.bf16.mxu0 %v736
      %1130 = vmatmul.mubr.bf16.gmra.mrb[0].mxu0 %v735
      %v1131 = vpop.f32.mrb[0].mxu0
      %v1132 = vadd.f32 0.0, %v1131
      %v1133 = vpop.f32.mrb[0].mxu0
      %v1134 = vpop.f32.mrb[0].mxu0
      %v1135 = vadd.f32 0.0, %v1134
      %v1136 = vpop.f32.mrb[0].mxu0
      %1137 = vmatprep.mubr.bf16.mxu0 %v738
      %1138 = vmatmul.mubr.bf16.gmra.mrb[0].mxu0 %v737
      %v1139 = vpop.f32.mrb[0].mxu0
      %v1140 = vadd.f32 0.0, %v1139
      %v1141 = vpop.f32.mrb[0].mxu0
      %v1142 = vpop.f32.mrb[0].mxu0
      %v1143 = vadd.f32 0.0, %v1142
      %v1144 = vpop.f32.mrb[0].mxu0
      %1145 = vmatprep.mubr.bf16.mxu0 %v740
      %1146 = vmatmul.mubr.bf16.gmra.mrb[0].mxu0 %v739
      %v1147 = vpop.f32.mrb[0].mxu0
      %v1148 = vadd.f32 0.0, %v1147
      %v1149 = vpop.f32.mrb[0].mxu0
      %v1150 = vpop.f32.mrb[0].mxu0
      %v1151 = vadd.f32 0.0, %v1150
      %v1152 = vpop.f32.mrb[0].mxu0
      %1153 = vmatprep.mubr.bf16.mxu0 %v742
      %1154 = vmatmul.mubr.bf16.gmra.mrb[0].mxu0 %v741
      %v1155 = vpop.f32.mrb[0].mxu0
      %v1156 = vadd.f32 0.0, %v1155
      %v1157 = vpop.f32.mrb[0].mxu0
      %v1158 = vpop.f32.mrb[0].mxu0
      %v1159 = vadd.f32 0.0, %v1158
      %v1160 = vpop.f32.mrb[0].mxu0
      %1161 = vmatprep.mubr.bf16.mxu0 %v744
      %1162 = vmatmul.mubr.bf16.gmra.mrb[0].mxu0 %v743
      %v1163 = vpop.f32.mrb[0].mxu0
      %v1164 = vadd.f32 0.0, %v1163
      %v1165 = vpop.f32.mrb[0].mxu0
      %v1166 = vpop.f32.mrb[0].mxu0
      %v1167 = vadd.f32 0.0, %v1166
      %v1168 = vpop.f32.mrb[0].mxu0
      %1169 = vmatprep.mubr.bf16.mxu0 %v746
      %1170 = vmatmul.mubr.bf16.gmra.mrb[0].mxu0 %v745
      %v1171 = vpop.f32.mrb[0].mxu0
      %v1172 = vadd.f32 0.0, %v1171
      %v1173 = vpop.f32.mrb[0].mxu0
      %v1174 = vpop.f32.mrb[0].mxu0
      %v1175 = vadd.f32 0.0, %v1174
      %v1176 = vpop.f32.mrb[0].mxu0
      %1177 = vmatprep.mubr.bf16.mxu0 %v748
      %1178 = vmatmul.mubr.bf16.gmra.mrb[0].mxu0 %v747
      %v1179 = vpop.f32.mrb[0].mxu0
      %v1180 = vadd.f32 0.0, %v1179
      %v1181 = vpop.f32.mrb[0].mxu0
      %v1182 = vpop.f32.mrb[0].mxu0
      %v1183 = vadd.f32 0.0, %v1182
      %v1184 = vpop.f32.mrb[0].mxu0
      %1185 = vmatprep.mubr.bf16.mxu0 %v750
      %1186 = vmatmul.mubr.bf16.gmra.mrb[0].mxu0 %v749
      %v1187 = vpop.f32.mrb[0].mxu0
      %v1188 = vadd.f32 0.0, %v1187
      %v1189 = vpop.f32.mrb[0].mxu0
      %v1190 = vpop.f32.mrb[0].mxu0
      %v1191 = vadd.f32 0.0, %v1190
      %v1192 = vpop.f32.mrb[0].mxu0
      %1193 = vmatprep.mubr.bf16.mxu0 %v752
      %1194 = vmatmul.mubr.bf16.gmra.mrb[0].mxu0 %v751
      %v1195 = vpop.f32.mrb[0].mxu0
      %v1196 = vadd.f32 0.0, %v1195
      %v1197 = vpop.f32.mrb[0].mxu0
      %v1198 = vpop.f32.mrb[0].mxu0
      %v1199 = vadd.f32 0.0, %v1198
      %v1200 = vpop.f32.mrb[0].mxu0
      %1201 = vdwg.mxu0
      %v1202 = vadd.f32 %v337, %v948
      %v1203 = vadd.f32 %v338, %v951
      %v1204 = vadd.f32 %v339, %v956
      %v1205 = vadd.f32 %v340, %v959
      %v1206 = vadd.f32 %v341, %v964
      %v1207 = vadd.f32 %v342, %v967
      %v1208 = vadd.f32 %v343, %v972
      %v1209 = vadd.f32 %v344, %v975
      %v1210 = vadd.f32 %v345, %v980
      %v1211 = vadd.f32 %v346, %v983
      %v1212 = vadd.f32 %v347, %v988
      %v1213 = vadd.f32 %v348, %v991
      %v1214 = vadd.f32 %v349, %v996
      %v1215 = vadd.f32 %v350, %v999
      %v1216 = vadd.f32 %v351, %v1004
      %v1217 = vadd.f32 %v352, %v1007
      %v1218 = vadd.f32 %v353, %v1012
      %v1219 = vadd.f32 %v354, %v1015
      %v1220 = vadd.f32 %v355, %v1020
      %v1221 = vadd.f32 %v356, %v1023
      %v1222 = vadd.f32 %v357, %v1028
      %v1223 = vadd.f32 %v358, %v1031
      %v1224 = vadd.f32 %v359, %v1036
      %v1225 = vadd.f32 %v360, %v1039
      %v1226 = vadd.f32 %v361, %v1044
      %v1227 = vadd.f32 %v362, %v1047
      %v1228 = vadd.f32 %v363, %v1052
      %v1229 = vadd.f32 %v364, %v1055
      %v1230 = vadd.f32 %v365, %v1060
      %v1231 = vadd.f32 %v366, %v1063
      %v1232 = vadd.f32 %v367, %v1068
      %v1233 = vadd.f32 %v368, %v1071
      %v1234 = vadd.f32 %v369, %v1076
      %v1235 = vadd.f32 %v370, %v1079
      %v1236 = vadd.f32 %v371, %v1084
      %v1237 = vadd.f32 %v372, %v1087
      %v1238 = vadd.f32 %v373, %v1092
      %v1239 = vadd.f32 %v374, %v1095
      %v1240 = vadd.f32 %v375, %v1100
      %v1241 = vadd.f32 %v376, %v1103
      %v1242 = vadd.f32 %v377, %v1108
      %v1243 = vadd.f32 %v378, %v1111
      %v1244 = vadd.f32 %v379, %v1116
      %v1245 = vadd.f32 %v380, %v1119
      %v1246 = vadd.f32 %v381, %v1124
      %v1247 = vadd.f32 %v382, %v1127
      %v1248 = vadd.f32 %v383, %v1132
      %v1249 = vadd.f32 %v384, %v1135
      %v1250 = vadd.f32 %v385, %v1140
      %v1251 = vadd.f32 %v386, %v1143
      %v1252 = vadd.f32 %v387, %v1148
      %v1253 = vadd.f32 %v388, %v1151
      %v1254 = vadd.f32 %v389, %v1156
      %v1255 = vadd.f32 %v390, %v1159
      %v1256 = vadd.f32 %v391, %v1164
      %v1257 = vadd.f32 %v392, %v1167
      %v1258 = vadd.f32 %v393, %v1172
      %v1259 = vadd.f32 %v394, %v1175
      %v1260 = vadd.f32 %v395, %v1180
      %v1261 = vadd.f32 %v396, %v1183
      %v1262 = vadd.f32 %v397, %v1188
      %v1263 = vadd.f32 %v398, %v1191
      %v1264 = vadd.f32 %v399, %v1196
      %v1265 = vadd.f32 %v400, %v1199
      %vm1266 = vcmask 523264
      %1267 = vst.msk [vmem:[#allocation2] sm:$0xff] %vm1266, %v1202
      %1268 = vst.msk [vmem:[#allocation2 + $0x8] sm:$0xff] %vm1266, %v1203
      %1269 = vst.msk [vmem:[#allocation2 + $0x10] sm:$0xff] %vm1266, %v1204
      %1270 = vst.msk [vmem:[#allocation2 + $0x18] sm:$0xff] %vm1266, %v1205
      %1271 = vst.msk [vmem:[#allocation2 + $0x20] sm:$0xff] %vm1266, %v1206
      %1272 = vst.msk [vmem:[#allocation2 + $0x28] sm:$0xff] %vm1266, %v1207
      %1273 = vst.msk [vmem:[#allocation2 + $0x30] sm:$0xff] %vm1266, %v1208
      %1274 = vst.msk [vmem:[#allocation2 + $0x38] sm:$0xff] %vm1266, %v1209
      %1275 = vst.msk [vmem:[#allocation2 + $0x40] sm:$0xff] %vm1266, %v1210
      %1276 = vst.msk [vmem:[#allocation2 + $0x48] sm:$0xff] %vm1266, %v1211
      %1277 = vst.msk [vmem:[#allocation2 + $0x50] sm:$0xff] %vm1266, %v1212
      %1278 = vst.msk [vmem:[#allocation2 + $0x58] sm:$0xff] %vm1266, %v1213
      %1279 = vst.msk [vmem:[#allocation2 + $0x60] sm:$0xff] %vm1266, %v1214
      %1280 = vst.msk [vmem:[#allocation2 + $0x68] sm:$0xff] %vm1266, %v1215
      %1281 = vst.msk [vmem:[#allocation2 + $0x70] sm:$0xff] %vm1266, %v1216
      %1282 = vst.msk [vmem:[#allocation2 + $0x78] sm:$0xff] %vm1266, %v1217
      %1283 = vst.msk [vmem:[#allocation2 + $0x80] sm:$0xff] %vm1266, %v1218
      %1284 = vst.msk [vmem:[#allocation2 + $0x88] sm:$0xff] %vm1266, %v1219
      %1285 = vst.msk [vmem:[#allocation2 + $0x90] sm:$0xff] %vm1266, %v1220
      %1286 = vst.msk [vmem:[#allocation2 + $0x98] sm:$0xff] %vm1266, %v1221
      %1287 = vst.msk [vmem:[#allocation2 + $0xa0] sm:$0xff] %vm1266, %v1222
      %1288 = vst.msk [vmem:[#allocation2 + $0xa8] sm:$0xff] %vm1266, %v1223
      %1289 = vst.msk [vmem:[#allocation2 + $0xb0] sm:$0xff] %vm1266, %v1224
      %1290 = vst.msk [vmem:[#allocation2 + $0xb8] sm:$0xff] %vm1266, %v1225
      %1291 = vst.msk [vmem:[#allocation2 + $0xc0] sm:$0xff] %vm1266, %v1226
      %1292 = vst.msk [vmem:[#allocation2 + $0xc8] sm:$0xff] %vm1266, %v1227
      %1293 = vst.msk [vmem:[#allocation2 + $0xd0] sm:$0xff] %vm1266, %v1228
      %1294 = vst.msk [vmem:[#allocation2 + $0xd8] sm:$0xff] %vm1266, %v1229
      %1295 = vst.msk [vmem:[#allocation2 + $0xe0] sm:$0xff] %vm1266, %v1230
      %1296 = vst.msk [vmem:[#allocation2 + $0xe8] sm:$0xff] %vm1266, %v1231
      %1297 = vst.msk [vmem:[#allocation2 + $0xf0] sm:$0xff] %vm1266, %v1232
      %1298 = vst.msk [vmem:[#allocation2 + $0xf8] sm:$0xff] %vm1266, %v1233
      %1299 = vst.msk [vmem:[#allocation2 + $0x100] sm:$0xff] %vm1266, %v1234
      %1300 = vst.msk [vmem:[#allocation2 + $0x108] sm:$0xff] %vm1266, %v1235
      %1301 = vst.msk [vmem:[#allocation2 + $0x110] sm:$0xff] %vm1266, %v1236
      %1302 = vst.msk [vmem:[#allocation2 + $0x118] sm:$0xff] %vm1266, %v1237
      %1303 = vst.msk [vmem:[#allocation2 + $0x120] sm:$0xff] %vm1266, %v1238
      %1304 = vst.msk [vmem:[#allocation2 + $0x128] sm:$0xff] %vm1266, %v1239
      %1305 = vst.msk [vmem:[#allocation2 + $0x130] sm:$0xff] %vm1266, %v1240
      %1306 = vst.msk [vmem:[#allocation2 + $0x138] sm:$0xff] %vm1266, %v1241
      %1307 = vst.msk [vmem:[#allocation2 + $0x140] sm:$0xff] %vm1266, %v1242
      %1308 = vst.msk [vmem:[#allocation2 + $0x148] sm:$0xff] %vm1266, %v1243
      %1309 = vst.msk [vmem:[#allocation2 + $0x150] sm:$0xff] %vm1266, %v1244
      %1310 = vst.msk [vmem:[#allocation2 + $0x158] sm:$0xff] %vm1266, %v1245
      %1311 = vst.msk [vmem:[#allocation2 + $0x160] sm:$0xff] %vm1266, %v1246
      %1312 = vst.msk [vmem:[#allocation2 + $0x168] sm:$0xff] %vm1266, %v1247
      %1313 = vst.msk [vmem:[#allocation2 + $0x170] sm:$0xff] %vm1266, %v1248
      %1314 = vst.msk [vmem:[#allocation2 + $0x178] sm:$0xff] %vm1266, %v1249
      %1315 = vst.msk [vmem:[#allocation2 + $0x180] sm:$0xff] %vm1266, %v1250
      %1316 = vst.msk [vmem:[#allocation2 + $0x188] sm:$0xff] %vm1266, %v1251
      %1317 = vst.msk [vmem:[#allocation2 + $0x190] sm:$0xff] %vm1266, %v1252
      %1318 = vst.msk [vmem:[#allocation2 + $0x198] sm:$0xff] %vm1266, %v1253
      %1319 = vst.msk [vmem:[#allocation2 + $0x1a0] sm:$0xff] %vm1266, %v1254
      %1320 = vst.msk [vmem:[#allocation2 + $0x1a8] sm:$0xff] %vm1266, %v1255
      %1321 = vst.msk [vmem:[#allocation2 + $0x1b0] sm:$0xff] %vm1266, %v1256
      %1322 = vst.msk [vmem:[#allocation2 + $0x1b8] sm:$0xff] %vm1266, %v1257
      %1323 = vst.msk [vmem:[#allocation2 + $0x1c0] sm:$0xff] %vm1266, %v1258
      %1324 = vst.msk [vmem:[#allocation2 + $0x1c8] sm:$0xff] %vm1266, %v1259
      %1325 = vst.msk [vmem:[#allocation2 + $0x1d0] sm:$0xff] %vm1266, %v1260
      %1326 = vst.msk [vmem:[#allocation2 + $0x1d8] sm:$0xff] %vm1266, %v1261
      %1327 = vst.msk [vmem:[#allocation2 + $0x1e0] sm:$0xff] %vm1266, %v1262
      %1328 = vst.msk [vmem:[#allocation2 + $0x1e8] sm:$0xff] %vm1266, %v1263
      %1329 = vst.msk [vmem:[#allocation2 + $0x1f0] sm:$0xff] %vm1266, %v1264
      %1330 = vst.msk [vmem:[#allocation2 + $0x1f8] sm:$0xff] %vm1266, %v1265
      // Predicated region
      $region37: #{conv_bn.1} parent=31 // pred_check
        %p1331 = pneg %p268
      $region38: #{conv_bn.1} parent=31 // pred_check_branch
        %1333 = sbr.rel (%p1331) target = $region40
      $region39: #{conv_bn.1} parent=31 // pred_region
        %v1334 = vld [vmem:[#allocation2] sm:$0xff]
        %v1335 = vld [vmem:[#allocation2 + $0x8] sm:$0xff]
        %v1336 = vld [vmem:[#allocation2 + $0x10] sm:$0xff]
        %v1337 = vld [vmem:[#allocation2 + $0x18] sm:$0xff]
        %v1338 = vld [vmem:[#allocation2 + $0x20] sm:$0xff]
        %v1339 = vld [vmem:[#allocation2 + $0x28] sm:$0xff]
        %v1340 = vld [vmem:[#allocation2 + $0x30] sm:$0xff]
        %v1341 = vld [vmem:[#allocation2 + $0x38] sm:$0xff]
        %v1342 = vld [vmem:[#allocation2 + $0x40] sm:$0xff]
        %v1343 = vld [vmem:[#allocation2 + $0x48] sm:$0xff]
        %v1344 = vld [vmem:[#allocation2 + $0x50] sm:$0xff]
        %v1345 = vld [vmem:[#allocation2 + $0x58] sm:$0xff]
        %v1346 = vld [vmem:[#allocation2 + $0x60] sm:$0xff]
        %v1347 = vld [vmem:[#allocation2 + $0x68] sm:$0xff]
        %v1348 = vld [vmem:[#allocation2 + $0x70] sm:$0xff]
        %v1349 = vld [vmem:[#allocation2 + $0x78] sm:$0xff]
        %v1350 = vld [vmem:[#allocation2 + $0x80] sm:$0xff]
        %v1351 = vld [vmem:[#allocation2 + $0x88] sm:$0xff]
        %v1352 = vld [vmem:[#allocation2 + $0x90] sm:$0xff]
        %v1353 = vld [vmem:[#allocation2 + $0x98] sm:$0xff]
        %v1354 = vld [vmem:[#allocation2 + $0xa0] sm:$0xff]
        %v1355 = vld [vmem:[#allocation2 + $0xa8] sm:$0xff]
        %v1356 = vld [vmem:[#allocation2 + $0xb0] sm:$0xff]
        %v1357 = vld [vmem:[#allocation2 + $0xb8] sm:$0xff]
        %v1358 = vld [vmem:[#allocation2 + $0xc0] sm:$0xff]
        %v1359 = vld [vmem:[#allocation2 + $0xc8] sm:$0xff]
        %v1360 = vld [vmem:[#allocation2 + $0xd0] sm:$0xff]
        %v1361 = vld [vmem:[#allocation2 + $0xd8] sm:$0xff]
        %v1362 = vld [vmem:[#allocation2 + $0xe0] sm:$0xff]
        %v1363 = vld [vmem:[#allocation2 + $0xe8] sm:$0xff]
        %v1364 = vld [vmem:[#allocation2 + $0xf0] sm:$0xff]
        %v1365 = vld [vmem:[#allocation2 + $0xf8] sm:$0xff]
        %v1366 = vld [vmem:[#allocation2 + $0x100] sm:$0xff]
        %v1367 = vld [vmem:[#allocation2 + $0x108] sm:$0xff]
        %v1368 = vld [vmem:[#allocation2 + $0x110] sm:$0xff]
        %v1369 = vld [vmem:[#allocation2 + $0x118] sm:$0xff]
        %v1370 = vld [vmem:[#allocation2 + $0x120] sm:$0xff]
        %v1371 = vld [vmem:[#allocation2 + $0x128] sm:$0xff]
        %v1372 = vld [vmem:[#allocation2 + $0x130] sm:$0xff]
        %v1373 = vld [vmem:[#allocation2 + $0x138] sm:$0xff]
        %v1374 = vld [vmem:[#allocation2 + $0x140] sm:$0xff]
        %v1375 = vld [vmem:[#allocation2 + $0x148] sm:$0xff]
        %v1376 = vld [vmem:[#allocation2 + $0x150] sm:$0xff]
        %v1377 = vld [vmem:[#allocation2 + $0x158] sm:$0xff]
        %v1378 = vld [vmem:[#allocation2 + $0x160] sm:$0xff]
        %v1379 = vld [vmem:[#allocation2 + $0x168] sm:$0xff]
        %v1380 = vld [vmem:[#allocation2 + $0x170] sm:$0xff]
        %v1381 = vld [vmem:[#allocation2 + $0x178] sm:$0xff]
        %v1382 = vld [vmem:[#allocation2 + $0x180] sm:$0xff]
        %v1383 = vld [vmem:[#allocation2 + $0x188] sm:$0xff]
        %v1384 = vld [vmem:[#allocation2 + $0x190] sm:$0xff]
        %v1385 = vld [vmem:[#allocation2 + $0x198] sm:$0xff]
        %v1386 = vld [vmem:[#allocation2 + $0x1a0] sm:$0xff]
        %v1387 = vld [vmem:[#allocation2 + $0x1a8] sm:$0xff]
        %v1388 = vld [vmem:[#allocation2 + $0x1b0] sm:$0xff]
        %v1389 = vld [vmem:[#allocation2 + $0x1b8] sm:$0xff]
        %v1390 = vld [vmem:[#allocation2 + $0x1c0] sm:$0xff]
        %v1391 = vld [vmem:[#allocation2 + $0x1c8] sm:$0xff]
        %v1392 = vld [vmem:[#allocation2 + $0x1d0] sm:$0xff]
        %v1393 = vld [vmem:[#allocation2 + $0x1d8] sm:$0xff]
        %v1394 = vld [vmem:[#allocation2 + $0x1e0] sm:$0xff]
        %v1395 = vld [vmem:[#allocation2 + $0x1e8] sm:$0xff]
        %v1396 = vld [vmem:[#allocation2 + $0x1f0] sm:$0xff]
        %v1397 = vld [vmem:[#allocation2 + $0x1f8] sm:$0xff]
        %v1398 = vld [vmem:[%s257] sm:$0x1]
        %v1400 = vlaneseq
        %v1401 = vshrl.u32 %v1400, 7
        %v1402 = vsub.s32 0, %v1401
        %v1403 = vrot.slane %v1398, %v1402
        %v1405 = vadd.f32 %v1334, %v1403
        %v1406 = vadd.f32 %v1335, %v1403
        %v1407 = vadd.f32 %v1336, %v1403
        %v1408 = vadd.f32 %v1337, %v1403
        %v1409 = vadd.f32 %v1338, %v1403
        %v1410 = vadd.f32 %v1339, %v1403
        %v1411 = vadd.f32 %v1340, %v1403
        %v1412 = vadd.f32 %v1341, %v1403
        %v1413 = vadd.f32 %v1342, %v1403
        %v1414 = vadd.f32 %v1343, %v1403
        %v1415 = vadd.f32 %v1344, %v1403
        %v1416 = vadd.f32 %v1345, %v1403
        %v1417 = vadd.f32 %v1346, %v1403
        %v1418 = vadd.f32 %v1347, %v1403
        %v1419 = vadd.f32 %v1348, %v1403
        %v1420 = vadd.f32 %v1349, %v1403
        %v1421 = vadd.f32 %v1350, %v1403
        %v1422 = vadd.f32 %v1351, %v1403
        %v1423 = vadd.f32 %v1352, %v1403
        %v1424 = vadd.f32 %v1353, %v1403
        %v1425 = vadd.f32 %v1354, %v1403
        %v1426 = vadd.f32 %v1355, %v1403
        %v1427 = vadd.f32 %v1356, %v1403
        %v1428 = vadd.f32 %v1357, %v1403
        %v1429 = vadd.f32 %v1358, %v1403
        %v1430 = vadd.f32 %v1359, %v1403
        %v1431 = vadd.f32 %v1360, %v1403
        %v1432 = vadd.f32 %v1361, %v1403
        %v1433 = vadd.f32 %v1362, %v1403
        %v1434 = vadd.f32 %v1363, %v1403
        %v1435 = vadd.f32 %v1364, %v1403
        %v1436 = vadd.f32 %v1365, %v1403
        %v1437 = vadd.f32 %v1366, %v1403
        %v1438 = vadd.f32 %v1367, %v1403
        %v1439 = vadd.f32 %v1368, %v1403
        %v1440 = vadd.f32 %v1369, %v1403
        %v1441 = vadd.f32 %v1370, %v1403
        %v1442 = vadd.f32 %v1371, %v1403
        %v1443 = vadd.f32 %v1372, %v1403
        %v1444 = vadd.f32 %v1373, %v1403
        %v1445 = vadd.f32 %v1374, %v1403
        %v1446 = vadd.f32 %v1375, %v1403
        %v1447 = vadd.f32 %v1376, %v1403
        %v1448 = vadd.f32 %v1377, %v1403
        %v1449 = vadd.f32 %v1378, %v1403
        %v1450 = vadd.f32 %v1379, %v1403
        %v1451 = vadd.f32 %v1380, %v1403
        %v1452 = vadd.f32 %v1381, %v1403
        %v1453 = vadd.f32 %v1382, %v1403
        %v1454 = vadd.f32 %v1383, %v1403
        %v1455 = vadd.f32 %v1384, %v1403
        %v1456 = vadd.f32 %v1385, %v1403
        %v1457 = vadd.f32 %v1386, %v1403
        %v1458 = vadd.f32 %v1387, %v1403
        %v1459 = vadd.f32 %v1388, %v1403
        %v1460 = vadd.f32 %v1389, %v1403
        %v1461 = vadd.f32 %v1390, %v1403
        %v1462 = vadd.f32 %v1391, %v1403
        %v1463 = vadd.f32 %v1392, %v1403
        %v1464 = vadd.f32 %v1393, %v1403
        %v1465 = vadd.f32 %v1394, %v1403
        %v1466 = vadd.f32 %v1395, %v1403
        %v1467 = vadd.f32 %v1396, %v1403
        %v1468 = vadd.f32 %v1397, %v1403
        %v1469 = vmax.f32 %v1405, 0.0
        %v1470 = vmax.f32 %v1406, 0.0
        %v1471 = vmax.f32 %v1407, 0.0
        %v1472 = vmax.f32 %v1408, 0.0
        %v1473 = vmax.f32 %v1409, 0.0
        %v1474 = vmax.f32 %v1410, 0.0
        %v1475 = vmax.f32 %v1411, 0.0
        %v1476 = vmax.f32 %v1412, 0.0
        %v1477 = vmax.f32 %v1413, 0.0
        %v1478 = vmax.f32 %v1414, 0.0
        %v1479 = vmax.f32 %v1415, 0.0
        %v1480 = vmax.f32 %v1416, 0.0
        %v1481 = vmax.f32 %v1417, 0.0
        %v1482 = vmax.f32 %v1418, 0.0
        %v1483 = vmax.f32 %v1419, 0.0
        %v1484 = vmax.f32 %v1420, 0.0
        %v1485 = vmax.f32 %v1421, 0.0
        %v1486 = vmax.f32 %v1422, 0.0
        %v1487 = vmax.f32 %v1423, 0.0
        %v1488 = vmax.f32 %v1424, 0.0
        %v1489 = vmax.f32 %v1425, 0.0
        %v1490 = vmax.f32 %v1426, 0.0
        %v1491 = vmax.f32 %v1427, 0.0
        %v1492 = vmax.f32 %v1428, 0.0
        %v1493 = vmax.f32 %v1429, 0.0
        %v1494 = vmax.f32 %v1430, 0.0
        %v1495 = vmax.f32 %v1431, 0.0
        %v1496 = vmax.f32 %v1432, 0.0
        %v1497 = vmax.f32 %v1433, 0.0
        %v1498 = vmax.f32 %v1434, 0.0
        %v1499 = vmax.f32 %v1435, 0.0
        %v1500 = vmax.f32 %v1436, 0.0
        %v1501 = vmax.f32 %v1437, 0.0
        %v1502 = vmax.f32 %v1438, 0.0
        %v1503 = vmax.f32 %v1439, 0.0
        %v1504 = vmax.f32 %v1440, 0.0
        %v1505 = vmax.f32 %v1441, 0.0
        %v1506 = vmax.f32 %v1442, 0.0
        %v1507 = vmax.f32 %v1443, 0.0
        %v1508 = vmax.f32 %v1444, 0.0
        %v1509 = vmax.f32 %v1445, 0.0
        %v1510 = vmax.f32 %v1446, 0.0
        %v1511 = vmax.f32 %v1447, 0.0
        %v1512 = vmax.f32 %v1448, 0.0
        %v1513 = vmax.f32 %v1449, 0.0
        %v1514 = vmax.f32 %v1450, 0.0
        %v1515 = vmax.f32 %v1451, 0.0
        %v1516 = vmax.f32 %v1452, 0.0
        %v1517 = vmax.f32 %v1453, 0.0
        %v1518 = vmax.f32 %v1454, 0.0
        %v1519 = vmax.f32 %v1455, 0.0
        %v1520 = vmax.f32 %v1456, 0.0
        %v1521 = vmax.f32 %v1457, 0.0
        %v1522 = vmax.f32 %v1458, 0.0
        %v1523 = vmax.f32 %v1459, 0.0
        %v1524 = vmax.f32 %v1460, 0.0
        %v1525 = vmax.f32 %v1461, 0.0
        %v1526 = vmax.f32 %v1462, 0.0
        %v1527 = vmax.f32 %v1463, 0.0
        %v1528 = vmax.f32 %v1464, 0.0
        %v1529 = vmax.f32 %v1465, 0.0
        %v1530 = vmax.f32 %v1466, 0.0
        %v1531 = vmax.f32 %v1467, 0.0
        %v1532 = vmax.f32 %v1468, 0.0
        %v1533 = vpack.c.bf16 %v1470, %v1469
        %v1534 = vpack.c.bf16 %v1472, %v1471
        %v1535 = vpack.c.bf16 %v1474, %v1473
        %v1536 = vpack.c.bf16 %v1476, %v1475
        %v1537 = vpack.c.bf16 %v1478, %v1477
        %v1538 = vpack.c.bf16 %v1480, %v1479
        %v1539 = vpack.c.bf16 %v1482, %v1481
        %v1540 = vpack.c.bf16 %v1484, %v1483
        %v1541 = vpack.c.bf16 %v1486, %v1485
        %v1542 = vpack.c.bf16 %v1488, %v1487
        %v1543 = vpack.c.bf16 %v1490, %v1489
        %v1544 = vpack.c.bf16 %v1492, %v1491
        %v1545 = vpack.c.bf16 %v1494, %v1493
        %v1546 = vpack.c.bf16 %v1496, %v1495
        %v1547 = vpack.c.bf16 %v1498, %v1497
        %v1548 = vpack.c.bf16 %v1500, %v1499
        %v1549 = vpack.c.bf16 %v1502, %v1501
        %v1550 = vpack.c.bf16 %v1504, %v1503
        %v1551 = vpack.c.bf16 %v1506, %v1505
        %v1552 = vpack.c.bf16 %v1508, %v1507
        %v1553 = vpack.c.bf16 %v1510, %v1509
        %v1554 = vpack.c.bf16 %v1512, %v1511
        %v1555 = vpack.c.bf16 %v1514, %v1513
        %v1556 = vpack.c.bf16 %v1516, %v1515
        %v1557 = vpack.c.bf16 %v1518, %v1517
        %v1558 = vpack.c.bf16 %v1520, %v1519
        %v1559 = vpack.c.bf16 %v1522, %v1521
        %v1560 = vpack.c.bf16 %v1524, %v1523
        %v1561 = vpack.c.bf16 %v1526, %v1525
        %v1562 = vpack.c.bf16 %v1528, %v1527
        %v1563 = vpack.c.bf16 %v1530, %v1529
        %v1564 = vpack.c.bf16 %v1532, %v1531
        %v1597 = vunpack.c.l.b16 %v1533
        %v1598 = vunpack.c.h.b16 %v1533
        %v1599 = vunpack.c.l.b16 %v1534
        %v1600 = vunpack.c.h.b16 %v1534
        %v1601 = vunpack.c.l.b16 %v1535
        %v1602 = vunpack.c.h.b16 %v1535
        %v1603 = vunpack.c.l.b16 %v1536
        %v1604 = vunpack.c.h.b16 %v1536
        %v1605 = vunpack.c.l.b16 %v1537
        %v1606 = vunpack.c.h.b16 %v1537
        %v1607 = vunpack.c.l.b16 %v1538
        %v1608 = vunpack.c.h.b16 %v1538
        %v1609 = vunpack.c.l.b16 %v1539
        %v1610 = vunpack.c.h.b16 %v1539
        %v1611 = vunpack.c.l.b16 %v1540
        %v1612 = vunpack.c.h.b16 %v1540
        %v1613 = vunpack.c.l.b16 %v1541
        %v1614 = vunpack.c.h.b16 %v1541
        %v1615 = vunpack.c.l.b16 %v1542
        %v1616 = vunpack.c.h.b16 %v1542
        %v1617 = vunpack.c.l.b16 %v1543
        %v1618 = vunpack.c.h.b16 %v1543
        %v1619 = vunpack.c.l.b16 %v1544
        %v1620 = vunpack.c.h.b16 %v1544
        %v1621 = vunpack.c.l.b16 %v1545
        %v1622 = vunpack.c.h.b16 %v1545
        %v1623 = vunpack.c.l.b16 %v1546
        %v1624 = vunpack.c.h.b16 %v1546
        %v1625 = vunpack.c.l.b16 %v1547
        %v1626 = vunpack.c.h.b16 %v1547
        %v1627 = vunpack.c.l.b16 %v1548
        %v1628 = vunpack.c.h.b16 %v1548
        %v1629 = vunpack.c.l.b16 %v1549
        %v1630 = vunpack.c.h.b16 %v1549
        %v1631 = vunpack.c.l.b16 %v1550
        %v1632 = vunpack.c.h.b16 %v1550
        %v1633 = vunpack.c.l.b16 %v1551
        %v1634 = vunpack.c.h.b16 %v1551
        %v1635 = vunpack.c.l.b16 %v1552
        %v1636 = vunpack.c.h.b16 %v1552
        %v1637 = vunpack.c.l.b16 %v1553
        %v1638 = vunpack.c.h.b16 %v1553
        %v1639 = vunpack.c.l.b16 %v1554
        %v1640 = vunpack.c.h.b16 %v1554
        %v1641 = vunpack.c.l.b16 %v1555
        %v1642 = vunpack.c.h.b16 %v1555
        %v1643 = vunpack.c.l.b16 %v1556
        %v1644 = vunpack.c.h.b16 %v1556
        %v1645 = vunpack.c.l.b16 %v1557
        %v1646 = vunpack.c.h.b16 %v1557
        %v1647 = vunpack.c.l.b16 %v1558
        %v1648 = vunpack.c.h.b16 %v1558
        %v1649 = vunpack.c.l.b16 %v1559
        %v1650 = vunpack.c.h.b16 %v1559
        %v1651 = vunpack.c.l.b16 %v1560
        %v1652 = vunpack.c.h.b16 %v1560
        %v1653 = vunpack.c.l.b16 %v1561
        %v1654 = vunpack.c.h.b16 %v1561
        %v1655 = vunpack.c.l.b16 %v1562
        %v1656 = vunpack.c.h.b16 %v1562
        %v1657 = vunpack.c.l.b16 %v1563
        %v1658 = vunpack.c.h.b16 %v1563
        %v1659 = vunpack.c.l.b16 %v1564
        %v1660 = vunpack.c.h.b16 %v1564
        %v1661 = vpack.c.b16 %v1597, %v1597
        %v1662 = vpack.c.b16 %v1598, %v1598
        %v1663 = vpack.c.b16 %v1599, %v1599
        %v1664 = vpack.c.b16 %v1600, %v1600
        %v1665 = vpack.c.b16 %v1601, %v1601
        %v1666 = vpack.c.b16 %v1602, %v1602
        %v1667 = vpack.c.b16 %v1603, %v1603
        %v1668 = vpack.c.b16 %v1604, %v1604
        %v1669 = vpack.c.b16 %v1605, %v1605
        %v1670 = vpack.c.b16 %v1606, %v1606
        %v1671 = vpack.c.b16 %v1607, %v1607
        %v1672 = vpack.c.b16 %v1608, %v1608
        %v1673 = vpack.c.b16 %v1609, %v1609
        %v1674 = vpack.c.b16 %v1610, %v1610
        %v1675 = vpack.c.b16 %v1611, %v1611
        %v1676 = vpack.c.b16 %v1612, %v1612
        %v1677 = vpack.c.b16 %v1613, %v1613
        %v1678 = vpack.c.b16 %v1614, %v1614
        %v1679 = vpack.c.b16 %v1615, %v1615
        %v1680 = vpack.c.b16 %v1616, %v1616
        %v1681 = vpack.c.b16 %v1617, %v1617
        %v1682 = vpack.c.b16 %v1618, %v1618
        %v1683 = vpack.c.b16 %v1619, %v1619
        %v1684 = vpack.c.b16 %v1620, %v1620
        %v1685 = vpack.c.b16 %v1621, %v1621
        %v1686 = vpack.c.b16 %v1622, %v1622
        %v1687 = vpack.c.b16 %v1623, %v1623
        %v1688 = vpack.c.b16 %v1624, %v1624
        %v1689 = vpack.c.b16 %v1625, %v1625
        %v1690 = vpack.c.b16 %v1626, %v1626
        %v1691 = vpack.c.b16 %v1627, %v1627
        %v1692 = vpack.c.b16 %v1628, %v1628
        %v1693 = vpack.c.b16 %v1629, %v1629
        %v1694 = vpack.c.b16 %v1630, %v1630
        %v1695 = vpack.c.b16 %v1631, %v1631
        %v1696 = vpack.c.b16 %v1632, %v1632
        %v1697 = vpack.c.b16 %v1633, %v1633
        %v1698 = vpack.c.b16 %v1634, %v1634
        %v1699 = vpack.c.b16 %v1635, %v1635
        %v1700 = vpack.c.b16 %v1636, %v1636
        %v1701 = vpack.c.b16 %v1637, %v1637
        %v1702 = vpack.c.b16 %v1638, %v1638
        %v1703 = vpack.c.b16 %v1639, %v1639
        %v1704 = vpack.c.b16 %v1640, %v1640
        %v1705 = vpack.c.b16 %v1641, %v1641
        %v1706 = vpack.c.b16 %v1642, %v1642
        %v1707 = vpack.c.b16 %v1643, %v1643
        %v1708 = vpack.c.b16 %v1644, %v1644
        %v1709 = vpack.c.b16 %v1645, %v1645
        %v1710 = vpack.c.b16 %v1646, %v1646
        %v1711 = vpack.c.b16 %v1647, %v1647
        %v1712 = vpack.c.b16 %v1648, %v1648
        %v1713 = vpack.c.b16 %v1649, %v1649
        %v1714 = vpack.c.b16 %v1650, %v1650
        %v1715 = vpack.c.b16 %v1651, %v1651
        %v1716 = vpack.c.b16 %v1652, %v1652
        %v1717 = vpack.c.b16 %v1653, %v1653
        %v1718 = vpack.c.b16 %v1654, %v1654
        %v1719 = vpack.c.b16 %v1655, %v1655
        %v1720 = vpack.c.b16 %v1656, %v1656
        %v1721 = vpack.c.b16 %v1657, %v1657
        %v1722 = vpack.c.b16 %v1658, %v1658
        %v1723 = vpack.c.b16 %v1659, %v1659
        %v1724 = vpack.c.b16 %v1660, %v1660
        %vm1789 = vcmask 519168
        %1790 = vst.msk [vmem:[%s265] sm:$0xf] %vm1789, %v1661
        %1791 = vst.msk [vmem:[%s265 + $0x4] sm:$0xf] %vm1789, %v1662
        %1792 = vst.msk [vmem:[%s265 + $0x8] sm:$0xf] %vm1789, %v1663
        %1793 = vst.msk [vmem:[%s265 + $0xc] sm:$0xf] %vm1789, %v1664
        %1794 = vst.msk [vmem:[%s265 + $0x10] sm:$0xf] %vm1789, %v1665
        %1795 = vst.msk [vmem:[%s265 + $0x14] sm:$0xf] %vm1789, %v1666
        %1796 = vst.msk [vmem:[%s265 + $0x18] sm:$0xf] %vm1789, %v1667
        %1797 = vst.msk [vmem:[%s265 + $0x1c] sm:$0xf] %vm1789, %v1668
        %1798 = vst.msk [vmem:[%s265 + $0x20] sm:$0xf] %vm1789, %v1669
        %1799 = vst.msk [vmem:[%s265 + $0x24] sm:$0xf] %vm1789, %v1670
        %1800 = vst.msk [vmem:[%s265 + $0x28] sm:$0xf] %vm1789, %v1671
        %1801 = vst.msk [vmem:[%s265 + $0x2c] sm:$0xf] %vm1789, %v1672
        %1802 = vst.msk [vmem:[%s265 + $0x30] sm:$0xf] %vm1789, %v1673
        %1803 = vst.msk [vmem:[%s265 + $0x34] sm:$0xf] %vm1789, %v1674
        %1804 = vst.msk [vmem:[%s265 + $0x38] sm:$0xf] %vm1789, %v1675
        %1805 = vst.msk [vmem:[%s265 + $0x3c] sm:$0xf] %vm1789, %v1676
        %1806 = vst.msk [vmem:[%s265 + $0x40] sm:$0xf] %vm1789, %v1677
        %1807 = vst.msk [vmem:[%s265 + $0x44] sm:$0xf] %vm1789, %v1678
        %1808 = vst.msk [vmem:[%s265 + $0x48] sm:$0xf] %vm1789, %v1679
        %1809 = vst.msk [vmem:[%s265 + $0x4c] sm:$0xf] %vm1789, %v1680
        %1810 = vst.msk [vmem:[%s265 + $0x50] sm:$0xf] %vm1789, %v1681
        %1811 = vst.msk [vmem:[%s265 + $0x54] sm:$0xf] %vm1789, %v1682
        %1812 = vst.msk [vmem:[%s265 + $0x58] sm:$0xf] %vm1789, %v1683
        %1813 = vst.msk [vmem:[%s265 + $0x5c] sm:$0xf] %vm1789, %v1684
        %1814 = vst.msk [vmem:[%s265 + $0x60] sm:$0xf] %vm1789, %v1685
        %1815 = vst.msk [vmem:[%s265 + $0x64] sm:$0xf] %vm1789, %v1686
        %1816 = vst.msk [vmem:[%s265 + $0x68] sm:$0xf] %vm1789, %v1687
        %1817 = vst.msk [vmem:[%s265 + $0x6c] sm:$0xf] %vm1789, %v1688
        %1818 = vst.msk [vmem:[%s265 + $0x70] sm:$0xf] %vm1789, %v1689
        %1819 = vst.msk [vmem:[%s265 + $0x74] sm:$0xf] %vm1789, %v1690
        %1820 = vst.msk [vmem:[%s265 + $0x78] sm:$0xf] %vm1789, %v1691
        %1821 = vst.msk [vmem:[%s265 + $0x7c] sm:$0xf] %vm1789, %v1692
        %1822 = vst.msk [vmem:[%s265 + $0x80] sm:$0xf] %vm1789, %v1693
        %1823 = vst.msk [vmem:[%s265 + $0x84] sm:$0xf] %vm1789, %v1694
        %1824 = vst.msk [vmem:[%s265 + $0x88] sm:$0xf] %vm1789, %v1695
        %1825 = vst.msk [vmem:[%s265 + $0x8c] sm:$0xf] %vm1789, %v1696
        %1826 = vst.msk [vmem:[%s265 + $0x90] sm:$0xf] %vm1789, %v1697
        %1827 = vst.msk [vmem:[%s265 + $0x94] sm:$0xf] %vm1789, %v1698
        %1828 = vst.msk [vmem:[%s265 + $0x98] sm:$0xf] %vm1789, %v1699
        %1829 = vst.msk [vmem:[%s265 + $0x9c] sm:$0xf] %vm1789, %v1700
        %1830 = vst.msk [vmem:[%s265 + $0xa0] sm:$0xf] %vm1789, %v1701
        %1831 = vst.msk [vmem:[%s265 + $0xa4] sm:$0xf] %vm1789, %v1702
        %1832 = vst.msk [vmem:[%s265 + $0xa8] sm:$0xf] %vm1789, %v1703
        %1833 = vst.msk [vmem:[%s265 + $0xac] sm:$0xf] %vm1789, %v1704
        %1834 = vst.msk [vmem:[%s265 + $0xb0] sm:$0xf] %vm1789, %v1705
        %1835 = vst.msk [vmem:[%s265 + $0xb4] sm:$0xf] %vm1789, %v1706
        %1836 = vst.msk [vmem:[%s265 + $0xb8] sm:$0xf] %vm1789, %v1707
        %1837 = vst.msk [vmem:[%s265 + $0xbc] sm:$0xf] %vm1789, %v1708
        %1838 = vst.msk [vmem:[%s265 + $0xc0] sm:$0xf] %vm1789, %v1709
        %1839 = vst.msk [vmem:[%s265 + $0xc4] sm:$0xf] %vm1789, %v1710
        %1840 = vst.msk [vmem:[%s265 + $0xc8] sm:$0xf] %vm1789, %v1711
        %1841 = vst.msk [vmem:[%s265 + $0xcc] sm:$0xf] %vm1789, %v1712
        %1842 = vst.msk [vmem:[%s265 + $0xd0] sm:$0xf] %vm1789, %v1713
        %1843 = vst.msk [vmem:[%s265 + $0xd4] sm:$0xf] %vm1789, %v1714
        %1844 = vst.msk [vmem:[%s265 + $0xd8] sm:$0xf] %vm1789, %v1715
        %1845 = vst.msk [vmem:[%s265 + $0xdc] sm:$0xf] %vm1789, %v1716
        %1846 = vst.msk [vmem:[%s265 + $0xe0] sm:$0xf] %vm1789, %v1717
        %1847 = vst.msk [vmem:[%s265 + $0xe4] sm:$0xf] %vm1789, %v1718
        %1848 = vst.msk [vmem:[%s265 + $0xe8] sm:$0xf] %vm1789, %v1719
        %1849 = vst.msk [vmem:[%s265 + $0xec] sm:$0xf] %vm1789, %v1720
        %1850 = vst.msk [vmem:[%s265 + $0xf0] sm:$0xf] %vm1789, %v1721
        %1851 = vst.msk [vmem:[%s265 + $0xf4] sm:$0xf] %vm1789, %v1722
        %1852 = vst.msk [vmem:[%s265 + $0xf8] sm:$0xf] %vm1789, %v1723
        %1853 = vst.msk [vmem:[%s265 + $0xfc] sm:$0xf] %vm1789, %v1724
      $region40: #{conv_bn.1} parent=31 // pred_fallthru
        _
      %s1854 = smul.u32 64, %s19
      %p1855 = scmp.lt.s32.totalorder %s1854, 3135
      %s1856 = scalar_select %p1855, %s1854, 3135
      %p1857 = scmp.lt.s32.totalorder %s20, 0
      %s1858 = scalar_select %p1857, %s20, 0
      %s1859 = sadd.s32 %s1858, %s1856
      %s1860 = smul.addr %s1859, 4
      %s1861 = scalar_lea.vmem %s3, %s1860
      // Predicated region
      $region41: #{conv_bn.1} parent=31 // pred_check
        %p1862 = pneg %p135
      $region42: #{conv_bn.1} parent=31 // pred_check_branch
        %1864 = sbr.rel (%p1862) target = $region44
      $region43: #{conv_bn.1} parent=31 // pred_region
        %s1865 = smul.u32 64, %s19
      $region44: #{conv_bn.1} parent=31 // pred_fallthru
        _
    $region32: #{conv_bn.1} parent=5 // pred_fallthru
      _
    %p1866 = scmp.le.s32.totalorder 2, %s9
    // Predicated region
    $region45: #{conv_bn.1} parent=5 // pred_check
      %p1867 = pneg %p1866
    $region46: #{conv_bn.1} parent=5 // pred_check_branch
      %1869 = sbr.rel (%p1867) target = $region48
    $region47: #{conv_bn.1} parent=5 // pred_region
      %s1870 = ssub.s32 %s9, 2
      // Predicated region
      $region49: #{conv_bn.1} parent=47 // pred_check
        %p1871 = pneg %p141
      $region50: #{conv_bn.1} parent=47 // pred_check_branch
        %1873 = sbr.rel (%p1871) target = $region52
      $region51: #{conv_bn.1} parent=47 // pred_region
        %s1874 = smul.u32 64, %s22
        %p1875 = scmp.lt.s32.totalorder %s1874, 3135
        %s1876 = scalar_select %p1875, %s1874, 3135
        %p1877 = scmp.lt.s32.totalorder %s23, 0
        %s1878 = scalar_select %p1877, %s23, 0
        %s1879 = sadd.s32 %s1878, %s1876
        %s1880 = smul.addr %s1879, 4
        %s1881 = scalar_lea.vmem %s3, %s1880
      $region52: #{conv_bn.1} parent=47 // pred_fallthru
        _
    $region48: #{conv_bn.1} parent=5 // pred_fallthru
      _
  $region6: #{conv_bn.1} parent=0 // loop_footer
    %s13 = sadd.s32 1, %s9
  $region7: #{conv_bn.1} parent=0 // loop_footer_branch
    %8 = sbr.rel target = $region3
  $region8: #{conv_bn.1} parent=0 // loop_exit
    _

</llo_original>
